<compile_context>
chip_gen: v5e
topology: v5e:2x2
jax: 0.10.0
libtpu: 0.0.40
codegen_flags: <defaults>
</compile_context>

<pallas_src>
import functools
import math

import jax
import jax.numpy as jnp
from jax import lax
from jax.experimental import pallas as pl
from jax.experimental.pallas import tpu as pltpu


def _round_up(n, m):
    return -(-n // m) * m


def _pad_gate_blocks(w, H, H_pad):
    """Pad each of the 4 (i,f,g,o) gate blocks along axis 0 from H to H_pad rows."""
    if H_pad == H:
        return w
    parts = jnp.split(w, 4, axis=0)
    pad_width = [(0, H_pad - H)] + [(0, 0)] * (w.ndim - 1)
    return jnp.concatenate([jnp.pad(p, pad_width) for p in parts], axis=0)


def lstm_kernel(gx_ref, whh_ref, h_out_ref, h_sc, c_sc, *, H, Tc, T, T_pad):
    t_chunk = pl.program_id(1)

    @pl.when(t_chunk == 0)
    def _():
        h_sc[...] = jnp.zeros_like(h_sc)
        c_sc[...] = jnp.zeros_like(c_sc)

    whh = whh_ref[...]                 # (H, 4H) bf16 — hoisted out of the inner loop

    def step(j, carry):
        h, c = carry                   # f32 (Bc, H)
        # Recurrent projection on the MXU (bf16 operands, f32 accumulation) + the
        # precomputed input projection (bias already folded in) streamed as gates_x.
        gates = gx_ref[j].astype(jnp.float32) + jnp.dot(
            h.astype(jnp.bfloat16), whh, preferred_element_type=jnp.float32)
        i_g = jax.nn.sigmoid(gates[:, 0 * H:1 * H])
        f_g = jax.nn.sigmoid(gates[:, 1 * H:2 * H])
        g_g = jnp.tanh(gates[:, 2 * H:3 * H])
        o_g = jax.nn.sigmoid(gates[:, 3 * H:4 * H])
        c_new = f_g * c + i_g * g_g
        h_new = o_g * jnp.tanh(c_new)
        if T_pad != T:                 # static check: mask only emitted if time is padded
            valid = (t_chunk * Tc + j) < T
            h_new = jnp.where(valid, h_new, h)
            c_new = jnp.where(valid, c_new, c)
        return h_new, c_new

    h, c = lax.fori_loop(0, Tc, step, (h_sc[...], c_sc[...]), unroll=True)
    h_sc[...] = h
    c_sc[...] = c

    @pl.when(t_chunk == pl.num_programs(1) - 1)
    def _():
        h_out_ref[...] = h.astype(h_out_ref.dtype)


def lstm_hn(x, w_ih, w_hh, b_ih, b_hh, *, time_chunk=8, batch_chunks=2):
    """x: (B, T, D) float32. Returns h_n of shape (B, H) — same as torch h_n[0]."""
    B, T, D = x.shape
    H = w_hh.shape[1]                                       # w_hh: (4H, H)

    # ---- padding for lane/sublane alignment and chunking ----
    H_pad = _round_up(H, 128)
    bc_target = -(-B // batch_chunks)                       # ceil(B / batch_chunks)
    Bc = max(8, _round_up(bc_target, 8))                    # per-chunk batch, 8-sublane aligned
    nb = -(-B // Bc)
    B_pad = nb * Bc
    Tc = min(time_chunk, T)
    nt = -(-T // Tc)
    T_pad = nt * Tc

    # ---- pad weights / bias per gate block (i, f, g, o order, as in PyTorch) ----
    w_ih_p = _pad_gate_blocks(w_ih, H, H_pad)               # (4H_pad, D)
    w_hh_p = _pad_gate_blocks(w_hh, H, H_pad)               # (4H_pad, H)
    if H_pad != H:
        w_hh_p = jnp.pad(w_hh_p, ((0, 0), (0, H_pad - H)))  # (4H_pad, H_pad)
    bias_p = _pad_gate_blocks(b_ih + b_hh, H, H_pad)        # (4H_pad,)

    x_p = jnp.pad(x, ((0, B_pad - B), (0, 0), (0, 0))) if B_pad != B else x

    # ---- hoisted input projection: one big batched matmul, emitted in (T, B, 4H) ----
    gates_x = jnp.einsum("btd,gd->tbg", x_p, w_ih_p) + bias_p        # (T, B_pad, 4H_pad) f32
    gates_x = gates_x.astype(jnp.bfloat16)                           # halve streamed HBM bytes
    if T_pad != T:
        gates_x = jnp.pad(gates_x, ((0, T_pad - T), (0, 0), (0, 0)))

    whh_t = jnp.transpose(w_hh_p).astype(jnp.bfloat16)               # (H_pad, 4H_pad)

    kernel = functools.partial(lstm_kernel, H=H_pad, Tc=Tc, T=T, T_pad=T_pad)

    h_pad = pl.pallas_call(
        kernel,
        out_shape=jax.ShapeDtypeStruct((B_pad, H_pad), x.dtype),
        grid_spec=pltpu.PrefetchScalarGridSpec(
            num_scalar_prefetch=0,
            grid=(nb, nt),                                   # (batch chunks, time chunks)
            in_specs=[
                pl.BlockSpec((Tc, Bc, 4 * H_pad), lambda b, t: (t, b, 0)),
                pl.BlockSpec((H_pad, 4 * H_pad), lambda b, t: (0, 0)),
            ],
            out_specs=pl.BlockSpec((Bc, H_pad), lambda b, t: (b, 0)),
            scratch_shapes=[
                pltpu.VMEM((Bc, H_pad), jnp.float32),        # h state (f32)
                pltpu.VMEM((Bc, H_pad), jnp.float32),        # c state (f32)
            ],
        ),
        compiler_params=pltpu.CompilerParams(
            dimension_semantics=("parallel", "arbitrary"),   # batch parallel, time sequential
        ),
    )(gates_x, whh_t)

    return h_pad[:B, :H]


def lstm_hn_ref(x, w_ih, w_hh, b_ih, b_hh):
    """Pure-JAX f32 reference matching PyTorch nn.LSTM single-layer forward."""
    B, T, D = x.shape
    H = w_hh.shape[1]

    def step(carry, x_t):
        h, c = carry
        gates = x_t @ w_ih.T + h @ w_hh.T + b_ih + b_hh
        i_g, f_g, g_g, o_g = jnp.split(gates, 4, axis=-1)
        i_g = jax.nn.sigmoid(i_g)
        f_g = jax.nn.sigmoid(f_g)
        g_g = jnp.tanh(g_g)
        o_g = jax.nn.sigmoid(o_g)
        c = f_g * c + i_g * g_g
        h = o_g * jnp.tanh(c)
        return (h, c), None

    init = (jnp.zeros((B, H), jnp.float32), jnp.zeros((B, H), jnp.float32))
    (h, _), _ = jax.lax.scan(step, init, jnp.transpose(x, (1, 0, 2)))
    return h


if __name__ == "__main__":
    B, T, D = 16, 32, 32                                    # batch, seq, dim (= hidden)
    H = D

    key = jax.random.PRNGKey(0)
    kx, k1, k2, k3, k4 = jax.random.split(key, 5)

    # Deterministic params; same shapes/init-range as torch nn.LSTM (uniform ±1/sqrt(H)).
    bound = 1.0 / math.sqrt(H)
    x = jax.random.normal(kx, (B, T, D), dtype=jnp.float32)
    w_ih = jax.random.uniform(k1, (4 * H, D), jnp.float32, -bound, bound)
    w_hh = jax.random.uniform(k2, (4 * H, H), jnp.float32, -bound, bound)
    b_ih = jax.random.uniform(k3, (4 * H,), jnp.float32, -bound, bound)
    b_hh = jax.random.uniform(k4, (4 * H,), jnp.float32, -bound, bound)

    h_n = jax.block_until_ready(lstm_hn(x, w_ih, w_hh, b_ih, b_hh))
    h_ref = jax.block_until_ready(lstm_hn_ref(x, w_ih, w_hh, b_ih, b_hh))

    assert h_n.shape == (B, H)
    # bf16 MXU operands / bf16-streamed gates_x vs f32 reference -> loosened tolerance
    # (h/c state and accumulation stay f32, so drift over T stays small).
    assert jnp.allclose(h_n, h_ref, atol=2e-2, rtol=2e-2), "mismatch vs reference"
    print("KERNEL_OK")
</pallas_src>

<mosaic_0001>
module attributes {stable_mosaic.version = 11 : i64} {
  func.func @lstm_kernel(%arg0: i32, %arg1: i32, %arg2: memref<8x8x512xbf16, #tpu.memory_space<vmem>>, %arg3: memref<128x512xbf16, #tpu.memory_space<vmem>>, %arg4: memref<8x128xf32, #tpu.memory_space<vmem>>, %arg5: memref<8x128xf32, #tpu.memory_space<vmem>>, %arg6: memref<8x128xf32, #tpu.memory_space<vmem>>) attributes {dimension_semantics = [#tpu.dimension_semantics<parallel>, #tpu.dimension_semantics<arbitrary>], iteration_bounds = array<i64: 2, 4>, scalar_prefetch = 0 : i64, scratch_operands = 2 : i64, tpu.core_type = #tpu.core_type<tc>, window_params = [{transform_indices = @transform_0, window_bounds = array<i64: 8, 8, 512>}, {pipeline_mode = #tpu.pipeline_mode<synchronous>, transform_indices = @transform_1, window_bounds = array<i64: 128, 512>}, {transform_indices = @transform_2, window_bounds = array<i64: 8, 128>}]} {
    %c0_i32 = arith.constant 0 : i32
    %0 = arith.cmpi eq, %arg1, %c0_i32 : i32
    %1 = arith.extui %0 : i1 to i32
    %c0_i32_0 = arith.constant 0 : i32
    %2 = arith.cmpi ne, %1, %c0_i32_0 : i32
    scf.if %2 {
      %cst_60 = arith.constant 0.000000e+00 : f32
      %267 = vector.broadcast %cst_60 : f32 to vector<8x128xf32>
      %c0_61 = arith.constant 0 : index
      %c0_62 = arith.constant 0 : index
      %268 = vector.load %arg5[%c0_61, %c0_62] : memref<8x128xf32, #tpu.memory_space<vmem>>, vector<8x128xf32>
      tpu.vector_store %arg5[%c0_61, %c0_62], %267 {strides = array<i32>} : memref<8x128xf32, #tpu.memory_space<vmem>>, vector<8x128xf32>,
      %cst_63 = arith.constant 0.000000e+00 : f32
      %269 = vector.broadcast %cst_63 : f32 to vector<8x128xf32>
      %c0_64 = arith.constant 0 : index
      %c0_65 = arith.constant 0 : index
      %270 = vector.load %arg6[%c0_64, %c0_65] : memref<8x128xf32, #tpu.memory_space<vmem>>, vector<8x128xf32>
      tpu.vector_store %arg6[%c0_64, %c0_65], %269 {strides = array<i32>} : memref<8x128xf32, #tpu.memory_space<vmem>>, vector<8x128xf32>,
    } else {
    }
    %c0 = arith.constant 0 : index
    %c0_1 = arith.constant 0 : index
    %3 = vector.load %arg3[%c0, %c0_1] : memref<128x512xbf16, #tpu.memory_space<vmem>>, vector<128x512xbf16>
    %c0_2 = arith.constant 0 : index
    %c0_3 = arith.constant 0 : index
    %4 = vector.load %arg5[%c0_2, %c0_3] : memref<8x128xf32, #tpu.memory_space<vmem>>, vector<8x128xf32>
    %c0_4 = arith.constant 0 : index
    %c0_5 = arith.constant 0 : index
    %5 = vector.load %arg6[%c0_4, %c0_5] : memref<8x128xf32, #tpu.memory_space<vmem>>, vector<8x128xf32>
    %c0_i32_6 = arith.constant 0 : i32
    %6 = arith.index_cast %c0_i32_6 : i32 to index
    %c0_7 = arith.constant 0 : index
    %c0_8 = arith.constant 0 : index
    %7 = vector.load %arg2[%6, %c0_7, %c0_8] : memref<8x8x512xbf16, #tpu.memory_space<vmem>>, vector<1x8x512xbf16>
    %8 = vector.shape_cast %7 : vector<1x8x512xbf16> to vector<8x512xbf16>
    %9 = arith.extf %8 : vector<8x512xbf16> to vector<8x512xf32>
    %10 = arith.truncf %4 : vector<8x128xf32> to vector<8x128xbf16>
    %cst = arith.constant dense<0.000000e+00> : vector<8x512xf32>
    %11 = tpu.matmul %10, %3, %cst {dimension_numbers = #tpu.dot_dimension_numbers<[1], [0], [0], [1], [0, 0, 1, 1], [], []>} : vector<8x128xbf16>, vector<128x512xbf16>, vector<8x512xf32> -> vector<8x512xf32>
    %12 = arith.addf %9, %11 : vector<8x512xf32>
    %13 = vector.extract_strided_slice %12 {offsets = [0, 0], sizes = [8, 128], strides = [1, 1]} : vector<8x512xf32> to vector<8x128xf32>
    %14 = arith.negf %13 : vector<8x128xf32>
    %15 = math.exp %14 : vector<8x128xf32>
    %cst_9 = arith.constant 1.000000e+00 : f32
    %16 = vector.broadcast %cst_9 : f32 to vector<8x128xf32>
    %17 = arith.addf %16, %15 : vector<8x128xf32>
    %18 = arith.divf %16, %17 : vector<8x128xf32>
    %19 = vector.extract_strided_slice %12 {offsets = [0, 128], sizes = [8, 128], strides = [1, 1]} : vector<8x512xf32> to vector<8x128xf32>
    %20 = arith.negf %19 : vector<8x128xf32>
    %21 = math.exp %20 : vector<8x128xf32>
    %cst_10 = arith.constant 1.000000e+00 : f32
    %22 = vector.broadcast %cst_10 : f32 to vector<8x128xf32>
    %23 = arith.addf %22, %21 : vector<8x128xf32>
    %24 = arith.divf %22, %23 : vector<8x128xf32>
    %25 = vector.extract_strided_slice %12 {offsets = [0, 256], sizes = [8, 128], strides = [1, 1]} : vector<8x512xf32> to vector<8x128xf32>
    %26 = math.tanh %25 : vector<8x128xf32>
    %27 = vector.extract_strided_slice %12 {offsets = [0, 384], sizes = [8, 128], strides = [1, 1]} : vector<8x512xf32> to vector<8x128xf32>
    %28 = arith.negf %27 : vector<8x128xf32>
    %29 = math.exp %28 : vector<8x128xf32>
    %cst_11 = arith.constant 1.000000e+00 : f32
    %30 = vector.broadcast %cst_11 : f32 to vector<8x128xf32>
    %31 = arith.addf %30, %29 : vector<8x128xf32>
    %32 = arith.divf %30, %31 : vector<8x128xf32>
    %33 = arith.mulf %24, %5 : vector<8x128xf32>
    %34 = arith.mulf %18, %26 : vector<8x128xf32>
    %35 = arith.addf %33, %34 : vector<8x128xf32>
    %36 = math.tanh %35 : vector<8x128xf32>
    %37 = arith.mulf %32, %36 : vector<8x128xf32>
    %c1_i32 = arith.constant 1 : i32
    %38 = arith.index_cast %c1_i32 : i32 to index
    %c0_12 = arith.constant 0 : index
    %c0_13 = arith.constant 0 : index
    %39 = vector.load %arg2[%38, %c0_12, %c0_13] : memref<8x8x512xbf16, #tpu.memory_space<vmem>>, vector<1x8x512xbf16>
    %40 = vector.shape_cast %39 : vector<1x8x512xbf16> to vector<8x512xbf16>
    %41 = arith.extf %40 : vector<8x512xbf16> to vector<8x512xf32>
    %42 = arith.truncf %37 : vector<8x128xf32> to vector<8x128xbf16>
    %cst_14 = arith.constant dense<0.000000e+00> : vector<8x512xf32>
    %43 = tpu.matmul %42, %3, %cst_14 {dimension_numbers = #tpu.dot_dimension_numbers<[1], [0], [0], [1], [0, 0, 1, 1], [], []>} : vector<8x128xbf16>, vector<128x512xbf16>, vector<8x512xf32> -> vector<8x512xf32>
    %44 = arith.addf %41, %43 : vector<8x512xf32>
    %45 = vector.extract_strided_slice %44 {offsets = [0, 0], sizes = [8, 128], strides = [1, 1]} : vector<8x512xf32> to vector<8x128xf32>
    %46 = arith.negf %45 : vector<8x128xf32>
    %47 = math.exp %46 : vector<8x128xf32>
    %cst_15 = arith.constant 1.000000e+00 : f32
    %48 = vector.broadcast %cst_15 : f32 to vector<8x128xf32>
    %49 = arith.addf %48, %47 : vector<8x128xf32>
    %50 = arith.divf %48, %49 : vector<8x128xf32>
    %51 = vector.extract_strided_slice %44 {offsets = [0, 128], sizes = [8, 128], strides = [1, 1]} : vector<8x512xf32> to vector<8x128xf32>
    %52 = arith.negf %51 : vector<8x128xf32>
    %53 = math.exp %52 : vector<8x128xf32>
    %cst_16 = arith.constant 1.000000e+00 : f32
    %54 = vector.broadcast %cst_16 : f32 to vector<8x128xf32>
    %55 = arith.addf %54, %53 : vector<8x128xf32>
    %56 = arith.divf %54, %55 : vector<8x128xf32>
    %57 = vector.extract_strided_slice %44 {offsets = [0, 256], sizes = [8, 128], strides = [1, 1]} : vector<8x512xf32> to vector<8x128xf32>
    %58 = math.tanh %57 : vector<8x128xf32>
    %59 = vector.extract_strided_slice %44 {offsets = [0, 384], sizes = [8, 128], strides = [1, 1]} : vector<8x512xf32> to vector<8x128xf32>
    %60 = arith.negf %59 : vector<8x128xf32>
    %61 = math.exp %60 : vector<8x128xf32>
    %cst_17 = arith.constant 1.000000e+00 : f32
    %62 = vector.broadcast %cst_17 : f32 to vector<8x128xf32>
    %63 = arith.addf %62, %61 : vector<8x128xf32>
    %64 = arith.divf %62, %63 : vector<8x128xf32>
    %65 = arith.mulf %56, %35 : vector<8x128xf32>
    %66 = arith.mulf %50, %58 : vector<8x128xf32>
    %67 = arith.addf %65, %66 : vector<8x128xf32>
    %68 = math.tanh %67 : vector<8x128xf32>
    %69 = arith.mulf %64, %68 : vector<8x128xf32>
    %c2_i32 = arith.constant 2 : i32
    %70 = arith.index_cast %c2_i32 : i32 to index
    %c0_18 = arith.constant 0 : index
    %c0_19 = arith.constant 0 : index
    %71 = vector.load %arg2[%70, %c0_18, %c0_19] : memref<8x8x512xbf16, #tpu.memory_space<vmem>>, vector<1x8x512xbf16>
    %72 = vector.shape_cast %71 : vector<1x8x512xbf16> to vector<8x512xbf16>
    %73 = arith.extf %72 : vector<8x512xbf16> to vector<8x512xf32>
    %74 = arith.truncf %69 : vector<8x128xf32> to vector<8x128xbf16>
    %cst_20 = arith.constant dense<0.000000e+00> : vector<8x512xf32>
    %75 = tpu.matmul %74, %3, %cst_20 {dimension_numbers = #tpu.dot_dimension_numbers<[1], [0], [0], [1], [0, 0, 1, 1], [], []>} : vector<8x128xbf16>, vector<128x512xbf16>, vector<8x512xf32> -> vector<8x512xf32>
    %76 = arith.addf %73, %75 : vector<8x512xf32>
    %77 = vector.extract_strided_slice %76 {offsets = [0, 0], sizes = [8, 128], strides = [1, 1]} : vector<8x512xf32> to vector<8x128xf32>
    %78 = arith.negf %77 : vector<8x128xf32>
    %79 = math.exp %78 : vector<8x128xf32>
    %cst_21 = arith.constant 1.000000e+00 : f32
    %80 = vector.broadcast %cst_21 : f32 to vector<8x128xf32>
    %81 = arith.addf %80, %79 : vector<8x128xf32>
    %82 = arith.divf %80, %81 : vector<8x128xf32>
    %83 = vector.extract_strided_slice %76 {offsets = [0, 128], sizes = [8, 128], strides = [1, 1]} : vector<8x512xf32> to vector<8x128xf32>
    %84 = arith.negf %83 : vector<8x128xf32>
    %85 = math.exp %84 : vector<8x128xf32>
    %cst_22 = arith.constant 1.000000e+00 : f32
    %86 = vector.broadcast %cst_22 : f32 to vector<8x128xf32>
    %87 = arith.addf %86, %85 : vector<8x128xf32>
    %88 = arith.divf %86, %87 : vector<8x128xf32>
    %89 = vector.extract_strided_slice %76 {offsets = [0, 256], sizes = [8, 128], strides = [1, 1]} : vector<8x512xf32> to vector<8x128xf32>
    %90 = math.tanh %89 : vector<8x128xf32>
    %91 = vector.extract_strided_slice %76 {offsets = [0, 384], sizes = [8, 128], strides = [1, 1]} : vector<8x512xf32> to vector<8x128xf32>
    %92 = arith.negf %91 : vector<8x128xf32>
    %93 = math.exp %92 : vector<8x128xf32>
    %cst_23 = arith.constant 1.000000e+00 : f32
    %94 = vector.broadcast %cst_23 : f32 to vector<8x128xf32>
    %95 = arith.addf %94, %93 : vector<8x128xf32>
    %96 = arith.divf %94, %95 : vector<8x128xf32>
    %97 = arith.mulf %88, %67 : vector<8x128xf32>
    %98 = arith.mulf %82, %90 : vector<8x128xf32>
    %99 = arith.addf %97, %98 : vector<8x128xf32>
    %100 = math.tanh %99 : vector<8x128xf32>
    %101 = arith.mulf %96, %100 : vector<8x128xf32>
    %c3_i32 = arith.constant 3 : i32
    %102 = arith.index_cast %c3_i32 : i32 to index
    %c0_24 = arith.constant 0 : index
    %c0_25 = arith.constant 0 : index
    %103 = vector.load %arg2[%102, %c0_24, %c0_25] : memref<8x8x512xbf16, #tpu.memory_space<vmem>>, vector<1x8x512xbf16>
    %104 = vector.shape_cast %103 : vector<1x8x512xbf16> to vector<8x512xbf16>
    %105 = arith.extf %104 : vector<8x512xbf16> to vector<8x512xf32>
    %106 = arith.truncf %101 : vector<8x128xf32> to vector<8x128xbf16>
    %cst_26 = arith.constant dense<0.000000e+00> : vector<8x512xf32>
    %107 = tpu.matmul %106, %3, %cst_26 {dimension_numbers = #tpu.dot_dimension_numbers<[1], [0], [0], [1], [0, 0, 1, 1], [], []>} : vector<8x128xbf16>, vector<128x512xbf16>, vector<8x512xf32> -> vector<8x512xf32>
    %108 = arith.addf %105, %107 : vector<8x512xf32>
    %109 = vector.extract_strided_slice %108 {offsets = [0, 0], sizes = [8, 128], strides = [1, 1]} : vector<8x512xf32> to vector<8x128xf32>
    %110 = arith.negf %109 : vector<8x128xf32>
    %111 = math.exp %110 : vector<8x128xf32>
    %cst_27 = arith.constant 1.000000e+00 : f32
    %112 = vector.broadcast %cst_27 : f32 to vector<8x128xf32>
    %113 = arith.addf %112, %111 : vector<8x128xf32>
    %114 = arith.divf %112, %113 : vector<8x128xf32>
    %115 = vector.extract_strided_slice %108 {offsets = [0, 128], sizes = [8, 128], strides = [1, 1]} : vector<8x512xf32> to vector<8x128xf32>
    %116 = arith.negf %115 : vector<8x128xf32>
    %117 = math.exp %116 : vector<8x128xf32>
    %cst_28 = arith.constant 1.000000e+00 : f32
    %118 = vector.broadcast %cst_28 : f32 to vector<8x128xf32>
    %119 = arith.addf %118, %117 : vector<8x128xf32>
    %120 = arith.divf %118, %119 : vector<8x128xf32>
    %121 = vector.extract_strided_slice %108 {offsets = [0, 256], sizes = [8, 128], strides = [1, 1]} : vector<8x512xf32> to vector<8x128xf32>
    %122 = math.tanh %121 : vector<8x128xf32>
    %123 = vector.extract_strided_slice %108 {offsets = [0, 384], sizes = [8, 128], strides = [1, 1]} : vector<8x512xf32> to vector<8x128xf32>
    %124 = arith.negf %123 : vector<8x128xf32>
    %125 = math.exp %124 : vector<8x128xf32>
    %cst_29 = arith.constant 1.000000e+00 : f32
    %126 = vector.broadcast %cst_29 : f32 to vector<8x128xf32>
    %127 = arith.addf %126, %125 : vector<8x128xf32>
    %128 = arith.divf %126, %127 : vector<8x128xf32>
    %129 = arith.mulf %120, %99 : vector<8x128xf32>
    %130 = arith.mulf %114, %122 : vector<8x128xf32>
    %131 = arith.addf %129, %130 : vector<8x128xf32>
    %132 = math.tanh %131 : vector<8x128xf32>
    %133 = arith.mulf %128, %132 : vector<8x128xf32>
    %c4_i32 = arith.constant 4 : i32
    %134 = arith.index_cast %c4_i32 : i32 to index
    %c0_30 = arith.constant 0 : index
    %c0_31 = arith.constant 0 : index
    %135 = vector.load %arg2[%134, %c0_30, %c0_31] : memref<8x8x512xbf16, #tpu.memory_space<vmem>>, vector<1x8x512xbf16>
    %136 = vector.shape_cast %135 : vector<1x8x512xbf16> to vector<8x512xbf16>
    %137 = arith.extf %136 : vector<8x512xbf16> to vector<8x512xf32>
    %138 = arith.truncf %133 : vector<8x128xf32> to vector<8x128xbf16>
    %cst_32 = arith.constant dense<0.000000e+00> : vector<8x512xf32>
    %139 = tpu.matmul %138, %3, %cst_32 {dimension_numbers = #tpu.dot_dimension_numbers<[1], [0], [0], [1], [0, 0, 1, 1], [], []>} : vector<8x128xbf16>, vector<128x512xbf16>, vector<8x512xf32> -> vector<8x512xf32>
    %140 = arith.addf %137, %139 : vector<8x512xf32>
    %141 = vector.extract_strided_slice %140 {offsets = [0, 0], sizes = [8, 128], strides = [1, 1]} : vector<8x512xf32> to vector<8x128xf32>
    %142 = arith.negf %141 : vector<8x128xf32>
    %143 = math.exp %142 : vector<8x128xf32>
    %cst_33 = arith.constant 1.000000e+00 : f32
    %144 = vector.broadcast %cst_33 : f32 to vector<8x128xf32>
    %145 = arith.addf %144, %143 : vector<8x128xf32>
    %146 = arith.divf %144, %145 : vector<8x128xf32>
    %147 = vector.extract_strided_slice %140 {offsets = [0, 128], sizes = [8, 128], strides = [1, 1]} : vector<8x512xf32> to vector<8x128xf32>
    %148 = arith.negf %147 : vector<8x128xf32>
    %149 = math.exp %148 : vector<8x128xf32>
    %cst_34 = arith.constant 1.000000e+00 : f32
    %150 = vector.broadcast %cst_34 : f32 to vector<8x128xf32>
    %151 = arith.addf %150, %149 : vector<8x128xf32>
    %152 = arith.divf %150, %151 : vector<8x128xf32>
    %153 = vector.extract_strided_slice %140 {offsets = [0, 256], sizes = [8, 128], strides = [1, 1]} : vector<8x512xf32> to vector<8x128xf32>
    %154 = math.tanh %153 : vector<8x128xf32>
    %155 = vector.extract_strided_slice %140 {offsets = [0, 384], sizes = [8, 128], strides = [1, 1]} : vector<8x512xf32> to vector<8x128xf32>
    %156 = arith.negf %155 : vector<8x128xf32>
    %157 = math.exp %156 : vector<8x128xf32>
    %cst_35 = arith.constant 1.000000e+00 : f32
    %158 = vector.broadcast %cst_35 : f32 to vector<8x128xf32>
    %159 = arith.addf %158, %157 : vector<8x128xf32>
    %160 = arith.divf %158, %159 : vector<8x128xf32>
    %161 = arith.mulf %152, %131 : vector<8x128xf32>
    %162 = arith.mulf %146, %154 : vector<8x128xf32>
    %163 = arith.addf %161, %162 : vector<8x128xf32>
    %164 = math.tanh %163 : vector<8x128xf32>
    %165 = arith.mulf %160, %164 : vector<8x128xf32>
    %c5_i32 = arith.constant 5 : i32
    %166 = arith.index_cast %c5_i32 : i32 to index
    %c0_36 = arith.constant 0 : index
    %c0_37 = arith.constant 0 : index
    %167 = vector.load %arg2[%166, %c0_36, %c0_37] : memref<8x8x512xbf16, #tpu.memory_space<vmem>>, vector<1x8x512xbf16>
    %168 = vector.shape_cast %167 : vector<1x8x512xbf16> to vector<8x512xbf16>
    %169 = arith.extf %168 : vector<8x512xbf16> to vector<8x512xf32>
    %170 = arith.truncf %165 : vector<8x128xf32> to vector<8x128xbf16>
    %cst_38 = arith.constant dense<0.000000e+00> : vector<8x512xf32>
    %171 = tpu.matmul %170, %3, %cst_38 {dimension_numbers = #tpu.dot_dimension_numbers<[1], [0], [0], [1], [0, 0, 1, 1], [], []>} : vector<8x128xbf16>, vector<128x512xbf16>, vector<8x512xf32> -> vector<8x512xf32>
    %172 = arith.addf %169, %171 : vector<8x512xf32>
    %173 = vector.extract_strided_slice %172 {offsets = [0, 0], sizes = [8, 128], strides = [1, 1]} : vector<8x512xf32> to vector<8x128xf32>
    %174 = arith.negf %173 : vector<8x128xf32>
    %175 = math.exp %174 : vector<8x128xf32>
    %cst_39 = arith.constant 1.000000e+00 : f32
    %176 = vector.broadcast %cst_39 : f32 to vector<8x128xf32>
    %177 = arith.addf %176, %175 : vector<8x128xf32>
    %178 = arith.divf %176, %177 : vector<8x128xf32>
    %179 = vector.extract_strided_slice %172 {offsets = [0, 128], sizes = [8, 128], strides = [1, 1]} : vector<8x512xf32> to vector<8x128xf32>
    %180 = arith.negf %179 : vector<8x128xf32>
    %181 = math.exp %180 : vector<8x128xf32>
    %cst_40 = arith.constant 1.000000e+00 : f32
    %182 = vector.broadcast %cst_40 : f32 to vector<8x128xf32>
    %183 = arith.addf %182, %181 : vector<8x128xf32>
    %184 = arith.divf %182, %183 : vector<8x128xf32>
    %185 = vector.extract_strided_slice %172 {offsets = [0, 256], sizes = [8, 128], strides = [1, 1]} : vector<8x512xf32> to vector<8x128xf32>
    %186 = math.tanh %185 : vector<8x128xf32>
    %187 = vector.extract_strided_slice %172 {offsets = [0, 384], sizes = [8, 128], strides = [1, 1]} : vector<8x512xf32> to vector<8x128xf32>
    %188 = arith.negf %187 : vector<8x128xf32>
    %189 = math.exp %188 : vector<8x128xf32>
    %cst_41 = arith.constant 1.000000e+00 : f32
    %190 = vector.broadcast %cst_41 : f32 to vector<8x128xf32>
    %191 = arith.addf %190, %189 : vector<8x128xf32>
    %192 = arith.divf %190, %191 : vector<8x128xf32>
    %193 = arith.mulf %184, %163 : vector<8x128xf32>
    %194 = arith.mulf %178, %186 : vector<8x128xf32>
    %195 = arith.addf %193, %194 : vector<8x128xf32>
    %196 = math.tanh %195 : vector<8x128xf32>
    %197 = arith.mulf %192, %196 : vector<8x128xf32>
    %c6_i32 = arith.constant 6 : i32
    %198 = arith.index_cast %c6_i32 : i32 to index
    %c0_42 = arith.constant 0 : index
    %c0_43 = arith.constant 0 : index
    %199 = vector.load %arg2[%198, %c0_42, %c0_43] : memref<8x8x512xbf16, #tpu.memory_space<vmem>>, vector<1x8x512xbf16>
    %200 = vector.shape_cast %199 : vector<1x8x512xbf16> to vector<8x512xbf16>
    %201 = arith.extf %200 : vector<8x512xbf16> to vector<8x512xf32>
    %202 = arith.truncf %197 : vector<8x128xf32> to vector<8x128xbf16>
    %cst_44 = arith.constant dense<0.000000e+00> : vector<8x512xf32>
    %203 = tpu.matmul %202, %3, %cst_44 {dimension_numbers = #tpu.dot_dimension_numbers<[1], [0], [0], [1], [0, 0, 1, 1], [], []>} : vector<8x128xbf16>, vector<128x512xbf16>, vector<8x512xf32> -> vector<8x512xf32>
    %204 = arith.addf %201, %203 : vector<8x512xf32>
    %205 = vector.extract_strided_slice %204 {offsets = [0, 0], sizes = [8, 128], strides = [1, 1]} : vector<8x512xf32> to vector<8x128xf32>
    %206 = arith.negf %205 : vector<8x128xf32>
    %207 = math.exp %206 : vector<8x128xf32>
    %cst_45 = arith.constant 1.000000e+00 : f32
    %208 = vector.broadcast %cst_45 : f32 to vector<8x128xf32>
    %209 = arith.addf %208, %207 : vector<8x128xf32>
    %210 = arith.divf %208, %209 : vector<8x128xf32>
    %211 = vector.extract_strided_slice %204 {offsets = [0, 128], sizes = [8, 128], strides = [1, 1]} : vector<8x512xf32> to vector<8x128xf32>
    %212 = arith.negf %211 : vector<8x128xf32>
    %213 = math.exp %212 : vector<8x128xf32>
    %cst_46 = arith.constant 1.000000e+00 : f32
    %214 = vector.broadcast %cst_46 : f32 to vector<8x128xf32>
    %215 = arith.addf %214, %213 : vector<8x128xf32>
    %216 = arith.divf %214, %215 : vector<8x128xf32>
    %217 = vector.extract_strided_slice %204 {offsets = [0, 256], sizes = [8, 128], strides = [1, 1]} : vector<8x512xf32> to vector<8x128xf32>
    %218 = math.tanh %217 : vector<8x128xf32>
    %219 = vector.extract_strided_slice %204 {offsets = [0, 384], sizes = [8, 128], strides = [1, 1]} : vector<8x512xf32> to vector<8x128xf32>
    %220 = arith.negf %219 : vector<8x128xf32>
    %221 = math.exp %220 : vector<8x128xf32>
    %cst_47 = arith.constant 1.000000e+00 : f32
    %222 = vector.broadcast %cst_47 : f32 to vector<8x128xf32>
    %223 = arith.addf %222, %221 : vector<8x128xf32>
    %224 = arith.divf %222, %223 : vector<8x128xf32>
    %225 = arith.mulf %216, %195 : vector<8x128xf32>
    %226 = arith.mulf %210, %218 : vector<8x128xf32>
    %227 = arith.addf %225, %226 : vector<8x128xf32>
    %228 = math.tanh %227 : vector<8x128xf32>
    %229 = arith.mulf %224, %228 : vector<8x128xf32>
    %c7_i32 = arith.constant 7 : i32
    %230 = arith.index_cast %c7_i32 : i32 to index
    %c0_48 = arith.constant 0 : index
    %c0_49 = arith.constant 0 : index
    %231 = vector.load %arg2[%230, %c0_48, %c0_49] : memref<8x8x512xbf16, #tpu.memory_space<vmem>>, vector<1x8x512xbf16>
    %232 = vector.shape_cast %231 : vector<1x8x512xbf16> to vector<8x512xbf16>
    %233 = arith.extf %232 : vector<8x512xbf16> to vector<8x512xf32>
    %234 = arith.truncf %229 : vector<8x128xf32> to vector<8x128xbf16>
    %cst_50 = arith.constant dense<0.000000e+00> : vector<8x512xf32>
    %235 = tpu.matmul %234, %3, %cst_50 {dimension_numbers = #tpu.dot_dimension_numbers<[1], [0], [0], [1], [0, 0, 1, 1], [], []>} : vector<8x128xbf16>, vector<128x512xbf16>, vector<8x512xf32> -> vector<8x512xf32>
    %236 = arith.addf %233, %235 : vector<8x512xf32>
    %237 = vector.extract_strided_slice %236 {offsets = [0, 0], sizes = [8, 128], strides = [1, 1]} : vector<8x512xf32> to vector<8x128xf32>
    %238 = arith.negf %237 : vector<8x128xf32>
    %239 = math.exp %238 : vector<8x128xf32>
    %cst_51 = arith.constant 1.000000e+00 : f32
    %240 = vector.broadcast %cst_51 : f32 to vector<8x128xf32>
    %241 = arith.addf %240, %239 : vector<8x128xf32>
    %242 = arith.divf %240, %241 : vector<8x128xf32>
    %243 = vector.extract_strided_slice %236 {offsets = [0, 128], sizes = [8, 128], strides = [1, 1]} : vector<8x512xf32> to vector<8x128xf32>
    %244 = arith.negf %243 : vector<8x128xf32>
    %245 = math.exp %244 : vector<8x128xf32>
    %cst_52 = arith.constant 1.000000e+00 : f32
    %246 = vector.broadcast %cst_52 : f32 to vector<8x128xf32>
    %247 = arith.addf %246, %245 : vector<8x128xf32>
    %248 = arith.divf %246, %247 : vector<8x128xf32>
    %249 = vector.extract_strided_slice %236 {offsets = [0, 256], sizes = [8, 128], strides = [1, 1]} : vector<8x512xf32> to vector<8x128xf32>
    %250 = math.tanh %249 : vector<8x128xf32>
    %251 = vector.extract_strided_slice %236 {offsets = [0, 384], sizes = [8, 128], strides = [1, 1]} : vector<8x512xf32> to vector<8x128xf32>
    %252 = arith.negf %251 : vector<8x128xf32>
    %253 = math.exp %252 : vector<8x128xf32>
    %cst_53 = arith.constant 1.000000e+00 : f32
    %254 = vector.broadcast %cst_53 : f32 to vector<8x128xf32>
    %255 = arith.addf %254, %253 : vector<8x128xf32>
    %256 = arith.divf %254, %255 : vector<8x128xf32>
    %257 = arith.mulf %248, %227 : vector<8x128xf32>
    %258 = arith.mulf %242, %250 : vector<8x128xf32>
    %259 = arith.addf %257, %258 : vector<8x128xf32>
    %260 = math.tanh %259 : vector<8x128xf32>
    %261 = arith.mulf %256, %260 : vector<8x128xf32>
    %c8_i32 = arith.constant 8 : i32
    %c0_54 = arith.constant 0 : index
    %c0_55 = arith.constant 0 : index
    %262 = vector.load %arg5[%c0_54, %c0_55] : memref<8x128xf32, #tpu.memory_space<vmem>>, vector<8x128xf32>
    tpu.vector_store %arg5[%c0_54, %c0_55], %261 {strides = array<i32>} : memref<8x128xf32, #tpu.memory_space<vmem>>, vector<8x128xf32>,
    %c0_56 = arith.constant 0 : index
    %c0_57 = arith.constant 0 : index
    %263 = vector.load %arg6[%c0_56, %c0_57] : memref<8x128xf32, #tpu.memory_space<vmem>>, vector<8x128xf32>
    tpu.vector_store %arg6[%c0_56, %c0_57], %259 {strides = array<i32>} : memref<8x128xf32, #tpu.memory_space<vmem>>, vector<8x128xf32>,
    %c3_i32_58 = arith.constant 3 : i32
    %264 = arith.cmpi eq, %arg1, %c3_i32_58 : i32
    %265 = arith.extui %264 : i1 to i32
    %c0_i32_59 = arith.constant 0 : i32
    %266 = arith.cmpi ne, %265, %c0_i32_59 : i32
    scf.if %266 {
      %c0_60 = arith.constant 0 : index
      %c0_61 = arith.constant 0 : index
      %267 = vector.load %arg4[%c0_60, %c0_61] : memref<8x128xf32, #tpu.memory_space<vmem>>, vector<8x128xf32>
      tpu.vector_store %arg4[%c0_60, %c0_61], %261 {strides = array<i32>} : memref<8x128xf32, #tpu.memory_space<vmem>>, vector<8x128xf32>,
    } else {
    }
    return
  }
  func.func @transform_0(%arg0: i32, %arg1: i32) -> (i32, i32, i32) {
    %c0_i32 = arith.constant 0 : i32
    %c0_i32_0 = arith.constant 0 : i32
    return %arg1, %arg0, %c0_i32 : i32, i32, i32
  }
  func.func @transform_1(%arg0: i32, %arg1: i32) -> (i32, i32) {
    %c0_i32 = arith.constant 0 : i32
    %c0_i32_0 = arith.constant 0 : i32
    %c0_i32_1 = arith.constant 0 : i32
    return %c0_i32, %c0_i32_0 : i32, i32
  }
  func.func @transform_2(%arg0: i32, %arg1: i32) -> (i32, i32) {
    %c0_i32 = arith.constant 0 : i32
    %c0_i32_0 = arith.constant 0 : i32
    return %arg0, %c0_i32 : i32, i32
  }
}

</mosaic_0001>

<llo_original>
// kernel: tpu_custom_call.1
$region0: #{tpu_custom_call.1}
  #allocation0 [shape = 'u32[]', space=smem, size = 0x4, offset = 0x4, fixed_abs, tag = 'smem constant byte address 0x4 - core index']
  #allocation1 [shape = 'u32[72,128]{1,0:T(1,128)}', space=vmem, size = 0x9000, scoped, tag = 'internal scratch']
  #allocation2 [shape = 'f32[8,128]{1,0:T(8,128)}', space=vmem, size = 0x1000, scoped, tag = 'scratch operand']
  #allocation3 [shape = 'f32[8,128]{1,0:T(8,128)}', space=vmem, size = 0x1000, scoped, tag = 'scratch operand']
  %s0 = inlined_call_operand.hbm [shape: bf16[32,16,512], index: 0, kind: input, shape index: {}]
  %s1 = inlined_call_operand.hbm [shape: bf16[128,512], index: 1, kind: input, shape index: {}]
  %s2 = inlined_call_operand.hbm [shape: f32[16,128], index: 2, kind: output, shape index: {}]
  %s3 = sld [smem:[#allocation0]]
  $region57: #{tpu_custom_call.1} parent=0
    _
  %s5 = ssub.s32 1, %s3
  %s6 = scalar_select 0, %s5, %s3
  $region1: #{tpu_custom_call.1} parent=0
    #allocation4 [shape = 'u8[131072]{0}', space=vmem, size = 0x20000, scoped, tag = 'input window, operand 0']
    #allocation5 [shape = 's32[2]{0}', space=sflag, size = 0x8, scoped, tag = 'scoped memory for tpu_custom_call.1']
    #allocation6 [shape = 's32[2]{0}', space=sflag, size = 0x8, scoped, tag = 'scoped memory for tpu_custom_call.1']
    #allocation7 [shape = 'u8[131072]{0}', space=vmem, size = 0x20000, scoped, tag = 'input window, operand 1, single buffered']
    #allocation8 [shape = 's32[1]{0}', space=sflag, size = 0x4, scoped, tag = 'scoped memory for tpu_custom_call.1']
    #allocation9 [shape = 'u8[8192]{0}', space=vmem, size = 0x2000, scoped, tag = 'output window, operand 0']
    %7 = vsyncpa [#allocation5], 0
    %s8 = scalar_lea.sflag [#allocation5], 1
    %9 = vsyncpa %s8, 0
    %10 = vsyncpa [#allocation8], 0
    %11 = vsyncpa [#allocation6], 0
    %s12 = scalar_lea.sflag [#allocation6], 1
    %13 = vsyncpa %s12, 0
    loop: start=0, step=1, limit=10
    $region2: #{tpu_custom_call.1} parent=1 // loop_pre_header
      _
    $region3: #{tpu_custom_call.1} parent=1 // loop_header
      %s15 = sphi 0, %s19
      %p16 = scmp.ge.s32.totalorder %s15, 10
      %s22 = sphi 0, %s34
      %s23 = sphi 0, %s30
      %s24 = sphi 0, %s22
      %s25 = sphi 0, %s23
      %s26 = sphi 0, %s24
      %s27 = sphi 0, %s25
      %s39 = sphi 0, %s41
      %s42 = sphi 0, %s39
      %s43 = sphi 0, %s42
      %s59 = sphi 0, %s43
      %s63 = sphi 0, %s63
      %s65 = sphi 0, %s63
      %s66 = sphi 0, %s65
      %s80 = sphi 0, %s66
      %s86 = sphi 0, %s88
      %s89 = sphi 0, %s86
      %s90 = sphi 0, %s89
      %s106 = sphi 0, %s90
    $region4: #{tpu_custom_call.1} parent=1 // loop_header_branch
      %18 = sbr.rel (%p16) target = $region8
    $region5: #{tpu_custom_call.1} parent=1 // loop_body
      %s20 = ssub.s32 %s15, 1
      %s21 = ssub.s32 %s15, 2
      %s28 = sadd.s32 1, %s23
      %p29 = scmp.ge.s32.totalorder %s28, 4
      %s30 = scalar_select %p29, 0, %s28
      %s31 = sadd.s32 1, %s22
      %s32 = scalar_select %p29, %s31, %s22
      %p33 = scmp.ge.s32.totalorder %s32, 2
      %s34 = scalar_select %p33, 0, %s32
      %s35 = ssub.s32 %s23, %s30
      %s36 = ssub.s32 %s22, %s34
      %s37 = sor.u32 %s35, %s36
      %p38 = scmp.eq.s32.totalorder %s37, 0
      %s40 = sadd.s32 %s39, 1
      %s41 = scalar_select %p38, %s39, %s40
      %p44 = pneg %p38
      %p45 = scmp.eq.s32.totalorder %s15, 7
      %p46 = por %p44, %p45
      %p47 = scmp.ne.s32.totalorder %s39, %s42
      %p48 = scmp.eq.s32.totalorder %s15, 0
      %p49 = por %p47, %p48
      %p50 = scmp.ne.s32.totalorder %s39, %s42
      %p51 = scmp.eq.s32.totalorder %s20, 7
      %p52 = por %p50, %p51
      %p53 = scmp.ne.s32.totalorder %s42, %s43
      %p54 = scmp.eq.s32.totalorder %s20, 0
      %p55 = por %p53, %p54
      %p56 = scmp.ne.s32.totalorder %s42, %s43
      %p57 = scmp.eq.s32.totalorder %s21, 7
      %p58 = por %p56, %p57
      %p60 = scmp.ne.s32.totalorder %s43, %s59
      %p61 = scmp.eq.s32.totalorder %s21, 0
      %p62 = por %p60, %p61
      %s64 = sadd.s32 %s63, 1
      %p67 = scmp.eq.s32.totalorder %s15, 7
      %p68 = scmp.ne.s32.totalorder %s63, %s65
      %p69 = scmp.eq.s32.totalorder %s15, 0
      %p70 = por %p68, %p69
      %p71 = scmp.ne.s32.totalorder %s63, %s65
      %p72 = scmp.eq.s32.totalorder %s20, 7
      %p73 = por %p71, %p72
      %p74 = scmp.ne.s32.totalorder %s65, %s66
      %p75 = scmp.eq.s32.totalorder %s20, 0
      %p76 = por %p74, %p75
      %p77 = scmp.ne.s32.totalorder %s65, %s66
      %p78 = scmp.eq.s32.totalorder %s21, 7
      %p79 = por %p77, %p78
      %p81 = scmp.ne.s32.totalorder %s66, %s80
      %p82 = scmp.eq.s32.totalorder %s21, 0
      %p83 = por %p81, %p82
      %s84 = ssub.s32 %s22, %s34
      %p85 = scmp.eq.s32.totalorder %s84, 0
      %s87 = sadd.s32 %s86, 1
      %s88 = scalar_select %p85, %s86, %s87
      %p91 = pneg %p85
      %p92 = scmp.eq.s32.totalorder %s15, 7
      %p93 = por %p91, %p92
      %p94 = scmp.ne.s32.totalorder %s86, %s89
      %p95 = scmp.eq.s32.totalorder %s15, 0
      %p96 = por %p94, %p95
      %p97 = scmp.ne.s32.totalorder %s86, %s89
      %p98 = scmp.eq.s32.totalorder %s20, 7
      %p99 = por %p97, %p98
      %p100 = scmp.ne.s32.totalorder %s89, %s90
      %p101 = scmp.eq.s32.totalorder %s20, 0
      %p102 = por %p100, %p101
      %p103 = scmp.ne.s32.totalorder %s89, %s90
      %p104 = scmp.eq.s32.totalorder %s21, 7
      %p105 = por %p103, %p104
      %p107 = scmp.ne.s32.totalorder %s90, %s106
      %p108 = scmp.eq.s32.totalorder %s21, 0
      %p109 = por %p107, %p108
      %p110 = scmp.le.s32.totalorder 1, %s15
      %p111 = scmp.lt.s32.totalorder %s15, 9
      %p112 = pnand %p110, %p111
      %p113 = pneg %p112
      // Predicated region
      $region9: #{tpu_custom_call.1} parent=5 // pred_check
        _
      $region10: #{tpu_custom_call.1} parent=5 // pred_check_branch
        %115 = sbr.rel (%p112) target = $region12
      $region11: #{tpu_custom_call.1} parent=5 // pred_region
        %s116 = ssub.s32 %s15, 1
        // Predicated region
        $region13: #{tpu_custom_call.1} parent=11 // pred_check
          %p117 = pneg %p76
        $region14: #{tpu_custom_call.1} parent=11 // pred_check_branch
          %119 = sbr.rel (%p117) target = $region16
        $region15: #{tpu_custom_call.1} parent=11 // pred_region
          %121 = vsyncadd [#allocation8], 0
          %s122 = sshll.u32 %s1, 4
          %s123 = int_to_ptr.hbm [resolvable:$true] %s122
          %s124 = sshll.u32 [#allocation7], 4
          %s125 = int_to_ptr.vmem [resolvable:$true] %s124
          %130 = dma.hbm_to_vmem [thread:$0]  %s123, 4096, %s125, [#allocation8], 256, 256, 16
        $region16: #{tpu_custom_call.1} parent=11 // pred_fallthru
          _
      $region12: #{tpu_custom_call.1} parent=5 // pred_fallthru
        _
      %p131 = scmp.lt.s32.totalorder %s15, 8
      // Predicated region
      $region17: #{tpu_custom_call.1} parent=5 // pred_check
        %p132 = pneg %p131
      $region18: #{tpu_custom_call.1} parent=5 // pred_check_branch
        %134 = sbr.rel (%p132) target = $region20
      $region19: #{tpu_custom_call.1} parent=5 // pred_region
        // Predicated region
        $region21: #{tpu_custom_call.1} parent=19 // pred_check
          %p135 = pneg %p49
        $region22: #{tpu_custom_call.1} parent=19 // pred_check_branch
          %137 = sbr.rel (%p135) target = $region24
        $region23: #{tpu_custom_call.1} parent=19 // pred_region
          %s138 = sand.u32 %s39, 1
          %s139 = scalar_lea.sflag [#allocation5], %s138
          %s140 = sand.u32 %s39, 1
          %s141 = smul.addr %s140, 128
          %s142 = scalar_lea.vmem [#allocation4], %s141
          %s143 = smul.u32 8, %s23
          %145 = vsyncadd %s139, 0
          %s146 = smul.addr %s22, 4
          %s147 = smul.addr %s143, 8
          %s148 = sadd.s32 %s146, %s147
          %s149 = smul.addr %s148, 4
          %s150 = scalar_lea.hbm %s0, %s149
          %s151 = sshll.u32 %s150, 4
          %s152 = int_to_ptr.hbm [resolvable:$true] %s151
          %s153 = sshll.u32 %s142, 4
          %s154 = int_to_ptr.vmem [resolvable:$true] %s153
          %159 = dma.hbm_to_vmem [thread:$0]  %s152, 2048, %s154, %s139, 512, 256, 16
        $region24: #{tpu_custom_call.1} parent=19 // pred_fallthru
          _
      $region20: #{tpu_custom_call.1} parent=5 // pred_fallthru
        _
      %p160 = scmp.le.s32.totalorder 1, %s15
      %p161 = scmp.lt.s32.totalorder %s15, 9
      %p162 = pnand %p160, %p161
      %p163 = pneg %p162
      // Predicated region
      $region25: #{tpu_custom_call.1} parent=5 // pred_check
        _
      $region26: #{tpu_custom_call.1} parent=5 // pred_check_branch
        %165 = sbr.rel (%p162) target = $region28
      $region27: #{tpu_custom_call.1} parent=5 // pred_region
        %s166 = ssub.s32 %s15, 1
        %s167 = sand.u32 %s42, 1
        %s168 = scalar_lea.sflag [#allocation5], %s167
        %s169 = sand.u32 %s42, 1
        %s170 = smul.addr %s169, 128
        %s171 = scalar_lea.vmem [#allocation4], %s170
        // Predicated region
        $region29: #{tpu_custom_call.1} parent=27 // pred_check
          %p172 = pneg %p55
        $region30: #{tpu_custom_call.1} parent=27 // pred_check_branch
          %174 = sbr.rel (%p172) target = $region32
        $region31: #{tpu_custom_call.1} parent=27 // pred_region
          %176 = dma.done %s168, 2048
        $region32: #{tpu_custom_call.1} parent=27 // pred_fallthru
          _
        // Predicated region
        $region33: #{tpu_custom_call.1} parent=27 // pred_check
          %p177 = pneg %p76
        $region34: #{tpu_custom_call.1} parent=27 // pred_check_branch
          %179 = sbr.rel (%p177) target = $region36
        $region35: #{tpu_custom_call.1} parent=27 // pred_region
          %181 = dma.done [#allocation8], 4096
        $region36: #{tpu_custom_call.1} parent=27 // pred_fallthru
          _
        %s182 = sand.u32 %s42, 1
        %s183 = scalar_lea.sflag [#allocation5], %s182
        %s184 = sand.u32 %s42, 1
        %s185 = smul.addr %s184, 128
        %s186 = scalar_lea.vmem [#allocation4], %s185
        %p187 = pneg %p55
        %p188 = pneg %p52
        %p189 = pneg %p76
        %p190 = pneg %p73
        %p191 = pneg %p102
        %p192 = pneg %p99
        %s193 = sand.u32 %s89, 1
        %s194 = scalar_lea.sflag [#allocation6], %s193
        %s195 = sand.u32 %s89, 1
        %s196 = smul.addr %s195, 8
        %s197 = scalar_lea.vmem [#allocation9], %s196
        %s198 = smul.u32 8, %s25
        %p199 = scmp.eq.s32.totalorder %s25, 0
        // Predicated region
        $region37: #{tpu_custom_call.1} parent=27 // pred_check
          %p200 = pneg %p199
        $region38: #{tpu_custom_call.1} parent=27 // pred_check_branch
          %202 = sbr.rel (%p200) target = $region40
        $region39: #{tpu_custom_call.1} parent=27 // pred_region
          %203 = vst [vmem:[#allocation2] sm:$0xff] 0.0
          %204 = vst [vmem:[#allocation3] sm:$0xff] 0.0
        $region40: #{tpu_custom_call.1} parent=27 // pred_fallthru
          _
        %v205 = vld [vmem:[#allocation7] sm:$0xff]
        %v206 = vld [vmem:[#allocation7 + $0x8] sm:$0xff]
        %v207 = vld [vmem:[#allocation7 + $0x10] sm:$0xff]
        %v208 = vld [vmem:[#allocation7 + $0x18] sm:$0xff]
        %v209 = vld [vmem:[#allocation7 + $0x20] sm:$0xff]
        %v210 = vld [vmem:[#allocation7 + $0x28] sm:$0xff]
        %v211 = vld [vmem:[#allocation7 + $0x30] sm:$0xff]
        %v212 = vld [vmem:[#allocation7 + $0x38] sm:$0xff]
        %v213 = vld [vmem:[#allocation7 + $0x40] sm:$0xff]
        %v214 = vld [vmem:[#allocation7 + $0x48] sm:$0xff]
        %v215 = vld [vmem:[#allocation7 + $0x50] sm:$0xff]
        %v216 = vld [vmem:[#allocation7 + $0x58] sm:$0xff]
        %v217 = vld [vmem:[#allocation7 + $0x60] sm:$0xff]
        %v218 = vld [vmem:[#allocation7 + $0x68] sm:$0xff]
        %v219 = vld [vmem:[#allocation7 + $0x70] sm:$0xff]
        %v220 = vld [vmem:[#allocation7 + $0x78] sm:$0xff]
        %v221 = vld [vmem:[#allocation7 + $0x80] sm:$0xff]
        %v222 = vld [vmem:[#allocation7 + $0x88] sm:$0xff]
        %v223 = vld [vmem:[#allocation7 + $0x90] sm:$0xff]
        %v224 = vld [vmem:[#allocation7 + $0x98] sm:$0xff]
        %v225 = vld [vmem:[#allocation7 + $0xa0] sm:$0xff]
        %v226 = vld [vmem:[#allocation7 + $0xa8] sm:$0xff]
        %v227 = vld [vmem:[#allocation7 + $0xb0] sm:$0xff]
        %v228 = vld [vmem:[#allocation7 + $0xb8] sm:$0xff]
        %v229 = vld [vmem:[#allocation7 + $0xc0] sm:$0xff]
        %v230 = vld [vmem:[#allocation7 + $0xc8] sm:$0xff]
        %v231 = vld [vmem:[#allocation7 + $0xd0] sm:$0xff]
        %v232 = vld [vmem:[#allocation7 + $0xd8] sm:$0xff]
        %v233 = vld [vmem:[#allocation7 + $0xe0] sm:$0xff]
        %v234 = vld [vmem:[#allocation7 + $0xe8] sm:$0xff]
        %v235 = vld [vmem:[#allocation7 + $0xf0] sm:$0xff]
        %v236 = vld [vmem:[#allocation7 + $0xf8] sm:$0xff]
        %v237 = vld [vmem:[#allocation2] sm:$0xff]
        %v238 = vld [vmem:[#allocation3] sm:$0xff]
        %v239 = vld [vmem:[%s171] sm:$0xff]
        %v240 = vld [vmem:[%s171 + $0x8] sm:$0xff]
        %v241 = vunpack.c.l.bf16 %v239
        %v242 = vunpack.c.h.bf16 %v239
        %v243 = vunpack.c.l.bf16 %v240
        %v244 = vunpack.c.h.bf16 %v240
        %v245 = vpack.c.bf16 %v237, %v237
        %v278 = vunpack.c.l.b16 %v205
        %v279 = vunpack.c.h.b16 %v205
        %v280 = vunpack.c.l.b16 %v206
        %v281 = vunpack.c.h.b16 %v206
        %v282 = vunpack.c.l.b16 %v207
        %v283 = vunpack.c.h.b16 %v207
        %v284 = vunpack.c.l.b16 %v208
        %v285 = vunpack.c.h.b16 %v208
        %v286 = vunpack.c.l.b16 %v209
        %v287 = vunpack.c.h.b16 %v209
        %v288 = vunpack.c.l.b16 %v210
        %v289 = vunpack.c.h.b16 %v210
        %v290 = vunpack.c.l.b16 %v211
        %v291 = vunpack.c.h.b16 %v211
        %v292 = vunpack.c.l.b16 %v212
        %v293 = vunpack.c.h.b16 %v212
        %v294 = vunpack.c.l.b16 %v213
        %v295 = vunpack.c.h.b16 %v213
        %v296 = vunpack.c.l.b16 %v214
        %v297 = vunpack.c.h.b16 %v214
        %v298 = vunpack.c.l.b16 %v215
        %v299 = vunpack.c.h.b16 %v215
        %v300 = vunpack.c.l.b16 %v216
        %v301 = vunpack.c.h.b16 %v216
        %v302 = vunpack.c.l.b16 %v217
        %v303 = vunpack.c.h.b16 %v217
        %v304 = vunpack.c.l.b16 %v218
        %v305 = vunpack.c.h.b16 %v218
        %v306 = vunpack.c.l.b16 %v219
        %v307 = vunpack.c.h.b16 %v219
        %v308 = vunpack.c.l.b16 %v220
        %v309 = vunpack.c.h.b16 %v220
        %v310 = vunpack.c.l.b16 %v221
        %v311 = vunpack.c.h.b16 %v221
        %v312 = vunpack.c.l.b16 %v222
        %v313 = vunpack.c.h.b16 %v222
        %v314 = vunpack.c.l.b16 %v223
        %v315 = vunpack.c.h.b16 %v223
        %v316 = vunpack.c.l.b16 %v224
        %v317 = vunpack.c.h.b16 %v224
        %v318 = vunpack.c.l.b16 %v225
        %v319 = vunpack.c.h.b16 %v225
        %v320 = vunpack.c.l.b16 %v226
        %v321 = vunpack.c.h.b16 %v226
        %v322 = vunpack.c.l.b16 %v227
        %v323 = vunpack.c.h.b16 %v227
        %v324 = vunpack.c.l.b16 %v228
        %v325 = vunpack.c.h.b16 %v228
        %v326 = vunpack.c.l.b16 %v229
        %v327 = vunpack.c.h.b16 %v229
        %v328 = vunpack.c.l.b16 %v230
        %v329 = vunpack.c.h.b16 %v230
        %v330 = vunpack.c.l.b16 %v231
        %v331 = vunpack.c.h.b16 %v231
        %v332 = vunpack.c.l.b16 %v232
        %v333 = vunpack.c.h.b16 %v232
        %v334 = vunpack.c.l.b16 %v233
        %v335 = vunpack.c.h.b16 %v233
        %v336 = vunpack.c.l.b16 %v234
        %v337 = vunpack.c.h.b16 %v234
        %v338 = vunpack.c.l.b16 %v235
        %v339 = vunpack.c.h.b16 %v235
        %v340 = vunpack.c.l.b16 %v236
        %v341 = vunpack.c.h.b16 %v236
        %v342 = vpack.c.b16 %v282, %v278
        %v343 = vpack.c.b16 %v283, %v279
        %v344 = vpack.c.b16 %v284, %v280
        %v345 = vpack.c.b16 %v285, %v281
        %v346 = vpack.c.b16 %v290, %v286
        %v347 = vpack.c.b16 %v291, %v287
        %v348 = vpack.c.b16 %v292, %v288
        %v349 = vpack.c.b16 %v293, %v289
        %v350 = vpack.c.b16 %v298, %v294
        %v351 = vpack.c.b16 %v299, %v295
        %v352 = vpack.c.b16 %v300, %v296
        %v353 = vpack.c.b16 %v301, %v297
        %v354 = vpack.c.b16 %v306, %v302
        %v355 = vpack.c.b16 %v307, %v303
        %v356 = vpack.c.b16 %v308, %v304
        %v357 = vpack.c.b16 %v309, %v305
        %v358 = vpack.c.b16 %v314, %v310
        %v359 = vpack.c.b16 %v315, %v311
        %v360 = vpack.c.b16 %v316, %v312
        %v361 = vpack.c.b16 %v317, %v313
        %v362 = vpack.c.b16 %v322, %v318
        %v363 = vpack.c.b16 %v323, %v319
        %v364 = vpack.c.b16 %v324, %v320
        %v365 = vpack.c.b16 %v325, %v321
        %v366 = vpack.c.b16 %v330, %v326
        %v367 = vpack.c.b16 %v331, %v327
        %v368 = vpack.c.b16 %v332, %v328
        %v369 = vpack.c.b16 %v333, %v329
        %v370 = vpack.c.b16 %v338, %v334
        %v371 = vpack.c.b16 %v339, %v335
        %v372 = vpack.c.b16 %v340, %v336
        %v373 = vpack.c.b16 %v341, %v337
        %406 = vmatpush.bf16.msra.mxu0 %v370
        %407 = vmatpush.bf16.msra.mxu0 %v366
        %408 = vmatpush.bf16.msra.mxu0 %v362
        %409 = vmatpush.bf16.msra.mxu0 %v358
        %410 = vmatpush.bf16.msra.mxu0 %v354
        %411 = vmatpush.bf16.msra.mxu0 %v350
        %412 = vmatpush.bf16.msra.mxu0 %v346
        %413 = vmatpush.bf16.msra.mxu0 %v342
        %414 = vmatmul.bf16.gmra.mxu0 %v245
        %v415 = vpop.f32.mrf.mxu0
        %v416 = vadd.f32 0.0, %v415
        %v417 = vpop.f32.mrf.mxu0
        %418 = vdwg.mxu0
        %419 = vmatpush.bf16.msra.mxu0 %v371
        %420 = vmatpush.bf16.msra.mxu0 %v367
        %421 = vmatpush.bf16.msra.mxu0 %v363
        %422 = vmatpush.bf16.msra.mxu0 %v359
        %423 = vmatpush.bf16.msra.mxu0 %v355
        %424 = vmatpush.bf16.msra.mxu0 %v351
        %425 = vmatpush.bf16.msra.mxu0 %v347
        %426 = vmatpush.bf16.msra.mxu0 %v343
        %427 = vmatmul.bf16.gmra.mxu0 %v245
        %v428 = vpop.f32.mrf.mxu0
        %v429 = vadd.f32 0.0, %v428
        %v430 = vpop.f32.mrf.mxu0
        %431 = vdwg.mxu0
        %432 = vmatpush.bf16.msra.mxu0 %v372
        %433 = vmatpush.bf16.msra.mxu0 %v368
        %434 = vmatpush.bf16.msra.mxu0 %v364
        %435 = vmatpush.bf16.msra.mxu0 %v360
        %436 = vmatpush.bf16.msra.mxu0 %v356
        %437 = vmatpush.bf16.msra.mxu0 %v352
        %438 = vmatpush.bf16.msra.mxu0 %v348
        %439 = vmatpush.bf16.msra.mxu0 %v344
        %440 = vmatmul.bf16.gmra.mxu0 %v245
        %v441 = vpop.f32.mrf.mxu0
        %v442 = vadd.f32 0.0, %v441
        %v443 = vpop.f32.mrf.mxu0
        %444 = vdwg.mxu0
        %445 = vmatpush.bf16.msra.mxu0 %v373
        %446 = vmatpush.bf16.msra.mxu0 %v369
        %447 = vmatpush.bf16.msra.mxu0 %v365
        %448 = vmatpush.bf16.msra.mxu0 %v361
        %449 = vmatpush.bf16.msra.mxu0 %v357
        %450 = vmatpush.bf16.msra.mxu0 %v353
        %451 = vmatpush.bf16.msra.mxu0 %v349
        %452 = vmatpush.bf16.msra.mxu0 %v345
        %453 = vmatmul.bf16.gmra.mxu0 %v245
        %v454 = vpop.f32.mrf.mxu0
        %v455 = vadd.f32 0.0, %v454
        %v456 = vpop.f32.mrf.mxu0
        %457 = vdwg.mxu0
        %v458 = vadd.f32 %v241, %v416
        %v459 = vadd.f32 %v242, %v429
        %v460 = vadd.f32 %v243, %v442
        %v461 = vadd.f32 %v244, %v455
        %v462 = vxor.u32 %v458, 2147483648
        %v463 = vmul.f32 %v462, 1.442695
        %v464 = vpow.pop %v463
        %v465 = vadd.f32 %v464, 1.0
        %v466 = vrcp.pop %v465
        %v467 = vmul.f32 %v465, %v466
        %v468 = vsub.f32 1.0, %v467
        %v469 = vmul.f32 %v466, %v468
        %v470 = vadd.f32 %v466, %v469
        %vm471 = vweird.f32 %v465
        %vm472 = vweird.f32 %v466
        %vm473 = vmor %vm471, %vm472
        %v474 = vsel %vm473, %v466, %v470
        %v475 = vand.u32 2147483647, %v465
        %vm476 = vcmp.eq.f32.partialorder %v475, 8.507059e+37
        %v477 = vand.u32 %v465, 2147483648
        %v478 = vor.u32 1.1754944e-38, %v477
        %v479 = vsel %vm476, %v478, %v474
        %v480 = vmul.f32 1.0, %v479
        %v481 = vxor.u32 %v459, 2147483648
        %v482 = vmul.f32 %v481, 1.442695
        %v483 = vpow.pop %v482
        %v484 = vadd.f32 %v483, 1.0
        %v485 = vrcp.pop %v484
        %v486 = vmul.f32 %v484, %v485
        %v487 = vsub.f32 1.0, %v486
        %v488 = vmul.f32 %v485, %v487
        %v489 = vadd.f32 %v485, %v488
        %vm490 = vweird.f32 %v484
        %vm491 = vweird.f32 %v485
        %vm492 = vmor %vm490, %vm491
        %v493 = vsel %vm492, %v485, %v489
        %v494 = vand.u32 2147483647, %v484
        %vm495 = vcmp.eq.f32.partialorder %v494, 8.507059e+37
        %v496 = vand.u32 %v484, 2147483648
        %v497 = vor.u32 1.1754944e-38, %v496
        %v498 = vsel %vm495, %v497, %v493
        %v499 = vmul.f32 1.0, %v498
        %v500 = vtanh.pop %v460
        %v501 = vxor.u32 %v461, 2147483648
        %v502 = vmul.f32 %v501, 1.442695
        %v503 = vpow.pop %v502
        %v504 = vadd.f32 %v503, 1.0
        %v505 = vrcp.pop %v504
        %v506 = vmul.f32 %v504, %v505
        %v507 = vsub.f32 1.0, %v506
        %v508 = vmul.f32 %v505, %v507
        %v509 = vadd.f32 %v505, %v508
        %vm510 = vweird.f32 %v504
        %vm511 = vweird.f32 %v505
        %vm512 = vmor %vm510, %vm511
        %v513 = vsel %vm512, %v505, %v509
        %v514 = vand.u32 2147483647, %v504
        %vm515 = vcmp.eq.f32.partialorder %v514, 8.507059e+37
        %v516 = vand.u32 %v504, 2147483648
        %v517 = vor.u32 1.1754944e-38, %v516
        %v518 = vsel %vm515, %v517, %v513
        %v519 = vmul.f32 1.0, %v518
        %v520 = vmul.f32 %v499, %v238
        %v521 = vmul.f32 %v480, %v500
        %v522 = vadd.f32 %v520, %v521
        %v523 = vtanh.pop %v522
        %v524 = vmul.f32 %v519, %v523
        %s525 = scalar_lea.vmem %s171, 16 [#allocation4]
        %v526 = vld [vmem:[%s525] sm:$0xff]
        %v527 = vld [vmem:[%s525 + $0x8] sm:$0xff]
        %v528 = vunpack.c.l.bf16 %v526
        %v529 = vunpack.c.h.bf16 %v526
        %v530 = vunpack.c.l.bf16 %v527
        %v531 = vunpack.c.h.bf16 %v527
        %v532 = vpack.c.bf16 %v524, %v524
        %533 = vmatpush.bf16.msra.mxu0 %v370
        %534 = vmatpush.bf16.msra.mxu0 %v366
        %535 = vmatpush.bf16.msra.mxu0 %v362
        %536 = vmatpush.bf16.msra.mxu0 %v358
        %537 = vmatpush.bf16.msra.mxu0 %v354
        %538 = vmatpush.bf16.msra.mxu0 %v350
        %539 = vmatpush.bf16.msra.mxu0 %v346
        %540 = vmatpush.bf16.msra.mxu0 %v342
        %541 = vmatmul.bf16.gmra.mxu0 %v532
        %v542 = vpop.f32.mrf.mxu0
        %v543 = vadd.f32 0.0, %v542
        %v544 = vpop.f32.mrf.mxu0
        %545 = vdwg.mxu0
        %546 = vmatpush.bf16.msra.mxu0 %v371
        %547 = vmatpush.bf16.msra.mxu0 %v367
        %548 = vmatpush.bf16.msra.mxu0 %v363
        %549 = vmatpush.bf16.msra.mxu0 %v359
        %550 = vmatpush.bf16.msra.mxu0 %v355
        %551 = vmatpush.bf16.msra.mxu0 %v351
        %552 = vmatpush.bf16.msra.mxu0 %v347
        %553 = vmatpush.bf16.msra.mxu0 %v343
        %554 = vmatmul.bf16.gmra.mxu0 %v532
        %v555 = vpop.f32.mrf.mxu0
        %v556 = vadd.f32 0.0, %v555
        %v557 = vpop.f32.mrf.mxu0
        %558 = vdwg.mxu0
        %559 = vmatpush.bf16.msra.mxu0 %v372
        %560 = vmatpush.bf16.msra.mxu0 %v368
        %561 = vmatpush.bf16.msra.mxu0 %v364
        %562 = vmatpush.bf16.msra.mxu0 %v360
        %563 = vmatpush.bf16.msra.mxu0 %v356
        %564 = vmatpush.bf16.msra.mxu0 %v352
        %565 = vmatpush.bf16.msra.mxu0 %v348
        %566 = vmatpush.bf16.msra.mxu0 %v344
        %567 = vmatmul.bf16.gmra.mxu0 %v532
        %v568 = vpop.f32.mrf.mxu0
        %v569 = vadd.f32 0.0, %v568
        %v570 = vpop.f32.mrf.mxu0
        %571 = vdwg.mxu0
        %572 = vmatpush.bf16.msra.mxu0 %v373
        %573 = vmatpush.bf16.msra.mxu0 %v369
        %574 = vmatpush.bf16.msra.mxu0 %v365
        %575 = vmatpush.bf16.msra.mxu0 %v361
        %576 = vmatpush.bf16.msra.mxu0 %v357
        %577 = vmatpush.bf16.msra.mxu0 %v353
        %578 = vmatpush.bf16.msra.mxu0 %v349
        %579 = vmatpush.bf16.msra.mxu0 %v345
        %580 = vmatmul.bf16.gmra.mxu0 %v532
        %v581 = vpop.f32.mrf.mxu0
        %v582 = vadd.f32 0.0, %v581
        %v583 = vpop.f32.mrf.mxu0
        %584 = vdwg.mxu0
        %v585 = vadd.f32 %v528, %v543
        %v586 = vadd.f32 %v529, %v556
        %v587 = vadd.f32 %v530, %v569
        %v588 = vadd.f32 %v531, %v582
        %v589 = vxor.u32 %v585, 2147483648
        %v590 = vmul.f32 %v589, 1.442695
        %v591 = vpow.pop %v590
        %v592 = vadd.f32 %v591, 1.0
        %v593 = vrcp.pop %v592
        %v594 = vmul.f32 %v592, %v593
        %v595 = vsub.f32 1.0, %v594
        %v596 = vmul.f32 %v593, %v595
        %v597 = vadd.f32 %v593, %v596
        %vm598 = vweird.f32 %v592
        %vm599 = vweird.f32 %v593
        %vm600 = vmor %vm598, %vm599
        %v601 = vsel %vm600, %v593, %v597
        %v602 = vand.u32 2147483647, %v592
        %vm603 = vcmp.eq.f32.partialorder %v602, 8.507059e+37
        %v604 = vand.u32 %v592, 2147483648
        %v605 = vor.u32 1.1754944e-38, %v604
        %v606 = vsel %vm603, %v605, %v601
        %v607 = vmul.f32 1.0, %v606
        %v608 = vxor.u32 %v586, 2147483648
        %v609 = vmul.f32 %v608, 1.442695
        %v610 = vpow.pop %v609
        %v611 = vadd.f32 %v610, 1.0
        %v612 = vrcp.pop %v611
        %v613 = vmul.f32 %v611, %v612
        %v614 = vsub.f32 1.0, %v613
        %v615 = vmul.f32 %v612, %v614
        %v616 = vadd.f32 %v612, %v615
        %vm617 = vweird.f32 %v611
        %vm618 = vweird.f32 %v612
        %vm619 = vmor %vm617, %vm618
        %v620 = vsel %vm619, %v612, %v616
        %v621 = vand.u32 2147483647, %v611
        %vm622 = vcmp.eq.f32.partialorder %v621, 8.507059e+37
        %v623 = vand.u32 %v611, 2147483648
        %v624 = vor.u32 1.1754944e-38, %v623
        %v625 = vsel %vm622, %v624, %v620
        %v626 = vmul.f32 1.0, %v625
        %v627 = vtanh.pop %v587
        %v628 = vxor.u32 %v588, 2147483648
        %v629 = vmul.f32 %v628, 1.442695
        %v630 = vpow.pop %v629
        %v631 = vadd.f32 %v630, 1.0
        %v632 = vrcp.pop %v631
        %v633 = vmul.f32 %v631, %v632
        %v634 = vsub.f32 1.0, %v633
        %v635 = vmul.f32 %v632, %v634
        %v636 = vadd.f32 %v632, %v635
        %vm637 = vweird.f32 %v631
        %vm638 = vweird.f32 %v632
        %vm639 = vmor %vm637, %vm638
        %v640 = vsel %vm639, %v632, %v636
        %v641 = vand.u32 2147483647, %v631
        %vm642 = vcmp.eq.f32.partialorder %v641, 8.507059e+37
        %v643 = vand.u32 %v631, 2147483648
        %v644 = vor.u32 1.1754944e-38, %v643
        %v645 = vsel %vm642, %v644, %v640
        %v646 = vmul.f32 1.0, %v645
        %v647 = vmul.f32 %v626, %v522
        %v648 = vmul.f32 %v607, %v627
        %v649 = vadd.f32 %v647, %v648
        %v650 = vtanh.pop %v649
        %v651 = vmul.f32 %v646, %v650
        %s652 = scalar_lea.vmem %s171, 32 [#allocation4]
        %v653 = vld [vmem:[%s652] sm:$0xff]
        %v654 = vld [vmem:[%s652 + $0x8] sm:$0xff]
        %v655 = vunpack.c.l.bf16 %v653
        %v656 = vunpack.c.h.bf16 %v653
        %v657 = vunpack.c.l.bf16 %v654
        %v658 = vunpack.c.h.bf16 %v654
        %v659 = vpack.c.bf16 %v651, %v651
        %660 = vmatpush.bf16.msra.mxu0 %v370
        %661 = vmatpush.bf16.msra.mxu0 %v366
        %662 = vmatpush.bf16.msra.mxu0 %v362
        %663 = vmatpush.bf16.msra.mxu0 %v358
        %664 = vmatpush.bf16.msra.mxu0 %v354
        %665 = vmatpush.bf16.msra.mxu0 %v350
        %666 = vmatpush.bf16.msra.mxu0 %v346
        %667 = vmatpush.bf16.msra.mxu0 %v342
        %668 = vmatmul.bf16.gmra.mxu0 %v659
        %v669 = vpop.f32.mrf.mxu0
        %v670 = vadd.f32 0.0, %v669
        %v671 = vpop.f32.mrf.mxu0
        %672 = vdwg.mxu0
        %673 = vmatpush.bf16.msra.mxu0 %v371
        %674 = vmatpush.bf16.msra.mxu0 %v367
        %675 = vmatpush.bf16.msra.mxu0 %v363
        %676 = vmatpush.bf16.msra.mxu0 %v359
        %677 = vmatpush.bf16.msra.mxu0 %v355
        %678 = vmatpush.bf16.msra.mxu0 %v351
        %679 = vmatpush.bf16.msra.mxu0 %v347
        %680 = vmatpush.bf16.msra.mxu0 %v343
        %681 = vmatmul.bf16.gmra.mxu0 %v659
        %v682 = vpop.f32.mrf.mxu0
        %v683 = vadd.f32 0.0, %v682
        %v684 = vpop.f32.mrf.mxu0
        %685 = vdwg.mxu0
        %686 = vmatpush.bf16.msra.mxu0 %v372
        %687 = vmatpush.bf16.msra.mxu0 %v368
        %688 = vmatpush.bf16.msra.mxu0 %v364
        %689 = vmatpush.bf16.msra.mxu0 %v360
        %690 = vmatpush.bf16.msra.mxu0 %v356
        %691 = vmatpush.bf16.msra.mxu0 %v352
        %692 = vmatpush.bf16.msra.mxu0 %v348
        %693 = vmatpush.bf16.msra.mxu0 %v344
        %694 = vmatmul.bf16.gmra.mxu0 %v659
        %v695 = vpop.f32.mrf.mxu0
        %v696 = vadd.f32 0.0, %v695
        %v697 = vpop.f32.mrf.mxu0
        %698 = vdwg.mxu0
        %699 = vmatpush.bf16.msra.mxu0 %v373
        %700 = vmatpush.bf16.msra.mxu0 %v369
        %701 = vmatpush.bf16.msra.mxu0 %v365
        %702 = vmatpush.bf16.msra.mxu0 %v361
        %703 = vmatpush.bf16.msra.mxu0 %v357
        %704 = vmatpush.bf16.msra.mxu0 %v353
        %705 = vmatpush.bf16.msra.mxu0 %v349
        %706 = vmatpush.bf16.msra.mxu0 %v345
        %707 = vmatmul.bf16.gmra.mxu0 %v659
        %v708 = vpop.f32.mrf.mxu0
        %v709 = vadd.f32 0.0, %v708
        %v710 = vpop.f32.mrf.mxu0
        %711 = vdwg.mxu0
        %v712 = vadd.f32 %v655, %v670
        %v713 = vadd.f32 %v656, %v683
        %v714 = vadd.f32 %v657, %v696
        %v715 = vadd.f32 %v658, %v709
        %v716 = vxor.u32 %v712, 2147483648
        %v717 = vmul.f32 %v716, 1.442695
        %v718 = vpow.pop %v717
        %v719 = vadd.f32 %v718, 1.0
        %v720 = vrcp.pop %v719
        %v721 = vmul.f32 %v719, %v720
        %v722 = vsub.f32 1.0, %v721
        %v723 = vmul.f32 %v720, %v722
        %v724 = vadd.f32 %v720, %v723
        %vm725 = vweird.f32 %v719
        %vm726 = vweird.f32 %v720
        %vm727 = vmor %vm725, %vm726
        %v728 = vsel %vm727, %v720, %v724
        %v729 = vand.u32 2147483647, %v719
        %vm730 = vcmp.eq.f32.partialorder %v729, 8.507059e+37
        %v731 = vand.u32 %v719, 2147483648
        %v732 = vor.u32 1.1754944e-38, %v731
        %v733 = vsel %vm730, %v732, %v728
        %v734 = vmul.f32 1.0, %v733
        %v735 = vxor.u32 %v713, 2147483648
        %v736 = vmul.f32 %v735, 1.442695
        %v737 = vpow.pop %v736
        %v738 = vadd.f32 %v737, 1.0
        %v739 = vrcp.pop %v738
        %v740 = vmul.f32 %v738, %v739
        %v741 = vsub.f32 1.0, %v740
        %v742 = vmul.f32 %v739, %v741
        %v743 = vadd.f32 %v739, %v742
        %vm744 = vweird.f32 %v738
        %vm745 = vweird.f32 %v739
        %vm746 = vmor %vm744, %vm745
        %v747 = vsel %vm746, %v739, %v743
        %v748 = vand.u32 2147483647, %v738
        %vm749 = vcmp.eq.f32.partialorder %v748, 8.507059e+37
        %v750 = vand.u32 %v738, 2147483648
        %v751 = vor.u32 1.1754944e-38, %v750
        %v752 = vsel %vm749, %v751, %v747
        %v753 = vmul.f32 1.0, %v752
        %v754 = vtanh.pop %v714
        %v755 = vxor.u32 %v715, 2147483648
        %v756 = vmul.f32 %v755, 1.442695
        %v757 = vpow.pop %v756
        %v758 = vadd.f32 %v757, 1.0
        %v759 = vrcp.pop %v758
        %v760 = vmul.f32 %v758, %v759
        %v761 = vsub.f32 1.0, %v760
        %v762 = vmul.f32 %v759, %v761
        %v763 = vadd.f32 %v759, %v762
        %vm764 = vweird.f32 %v758
        %vm765 = vweird.f32 %v759
        %vm766 = vmor %vm764, %vm765
        %v767 = vsel %vm766, %v759, %v763
        %v768 = vand.u32 2147483647, %v758
        %vm769 = vcmp.eq.f32.partialorder %v768, 8.507059e+37
        %v770 = vand.u32 %v758, 2147483648
        %v771 = vor.u32 1.1754944e-38, %v770
        %v772 = vsel %vm769, %v771, %v767
        %v773 = vmul.f32 1.0, %v772
        %v774 = vmul.f32 %v753, %v649
        %v775 = vmul.f32 %v734, %v754
        %v776 = vadd.f32 %v774, %v775
        %v777 = vtanh.pop %v776
        %v778 = vmul.f32 %v773, %v777
        %s779 = scalar_lea.vmem %s171, 48 [#allocation4]
        %v780 = vld [vmem:[%s779] sm:$0xff]
        %v781 = vld [vmem:[%s779 + $0x8] sm:$0xff]
        %v782 = vunpack.c.l.bf16 %v780
        %v783 = vunpack.c.h.bf16 %v780
        %v784 = vunpack.c.l.bf16 %v781
        %v785 = vunpack.c.h.bf16 %v781
        %v786 = vpack.c.bf16 %v778, %v778
        %787 = vmatpush.bf16.msra.mxu0 %v370
        %788 = vmatpush.bf16.msra.mxu0 %v366
        %789 = vmatpush.bf16.msra.mxu0 %v362
        %790 = vmatpush.bf16.msra.mxu0 %v358
        %791 = vmatpush.bf16.msra.mxu0 %v354
        %792 = vmatpush.bf16.msra.mxu0 %v350
        %793 = vmatpush.bf16.msra.mxu0 %v346
        %794 = vmatpush.bf16.msra.mxu0 %v342
        %795 = vmatmul.bf16.gmra.mxu0 %v786
        %v796 = vpop.f32.mrf.mxu0
        %v797 = vadd.f32 0.0, %v796
        %v798 = vpop.f32.mrf.mxu0
        %799 = vdwg.mxu0
        %800 = vmatpush.bf16.msra.mxu0 %v371
        %801 = vmatpush.bf16.msra.mxu0 %v367
        %802 = vmatpush.bf16.msra.mxu0 %v363
        %803 = vmatpush.bf16.msra.mxu0 %v359
        %804 = vmatpush.bf16.msra.mxu0 %v355
        %805 = vmatpush.bf16.msra.mxu0 %v351
        %806 = vmatpush.bf16.msra.mxu0 %v347
        %807 = vmatpush.bf16.msra.mxu0 %v343
        %808 = vmatmul.bf16.gmra.mxu0 %v786
        %v809 = vpop.f32.mrf.mxu0
        %v810 = vadd.f32 0.0, %v809
        %v811 = vpop.f32.mrf.mxu0
        %812 = vdwg.mxu0
        %813 = vmatpush.bf16.msra.mxu0 %v372
        %814 = vmatpush.bf16.msra.mxu0 %v368
        %815 = vmatpush.bf16.msra.mxu0 %v364
        %816 = vmatpush.bf16.msra.mxu0 %v360
        %817 = vmatpush.bf16.msra.mxu0 %v356
        %818 = vmatpush.bf16.msra.mxu0 %v352
        %819 = vmatpush.bf16.msra.mxu0 %v348
        %820 = vmatpush.bf16.msra.mxu0 %v344
        %821 = vmatmul.bf16.gmra.mxu0 %v786
        %v822 = vpop.f32.mrf.mxu0
        %v823 = vadd.f32 0.0, %v822
        %v824 = vpop.f32.mrf.mxu0
        %825 = vdwg.mxu0
        %826 = vmatpush.bf16.msra.mxu0 %v373
        %827 = vmatpush.bf16.msra.mxu0 %v369
        %828 = vmatpush.bf16.msra.mxu0 %v365
        %829 = vmatpush.bf16.msra.mxu0 %v361
        %830 = vmatpush.bf16.msra.mxu0 %v357
        %831 = vmatpush.bf16.msra.mxu0 %v353
        %832 = vmatpush.bf16.msra.mxu0 %v349
        %833 = vmatpush.bf16.msra.mxu0 %v345
        %834 = vmatmul.bf16.gmra.mxu0 %v786
        %v835 = vpop.f32.mrf.mxu0
        %v836 = vadd.f32 0.0, %v835
        %v837 = vpop.f32.mrf.mxu0
        %838 = vdwg.mxu0
        %v839 = vadd.f32 %v782, %v797
        %v840 = vadd.f32 %v783, %v810
        %v841 = vadd.f32 %v784, %v823
        %v842 = vadd.f32 %v785, %v836
        %v843 = vxor.u32 %v839, 2147483648
        %v844 = vmul.f32 %v843, 1.442695
        %v845 = vpow.pop %v844
        %v846 = vadd.f32 %v845, 1.0
        %v847 = vrcp.pop %v846
        %v848 = vmul.f32 %v846, %v847
        %v849 = vsub.f32 1.0, %v848
        %v850 = vmul.f32 %v847, %v849
        %v851 = vadd.f32 %v847, %v850
        %vm852 = vweird.f32 %v846
        %vm853 = vweird.f32 %v847
        %vm854 = vmor %vm852, %vm853
        %v855 = vsel %vm854, %v847, %v851
        %v856 = vand.u32 2147483647, %v846
        %vm857 = vcmp.eq.f32.partialorder %v856, 8.507059e+37
        %v858 = vand.u32 %v846, 2147483648
        %v859 = vor.u32 1.1754944e-38, %v858
        %v860 = vsel %vm857, %v859, %v855
        %v861 = vmul.f32 1.0, %v860
        %v862 = vxor.u32 %v840, 2147483648
        %v863 = vmul.f32 %v862, 1.442695
        %v864 = vpow.pop %v863
        %v865 = vadd.f32 %v864, 1.0
        %v866 = vrcp.pop %v865
        %v867 = vmul.f32 %v865, %v866
        %v868 = vsub.f32 1.0, %v867
        %v869 = vmul.f32 %v866, %v868
        %v870 = vadd.f32 %v866, %v869
        %vm871 = vweird.f32 %v865
        %vm872 = vweird.f32 %v866
        %vm873 = vmor %vm871, %vm872
        %v874 = vsel %vm873, %v866, %v870
        %v875 = vand.u32 2147483647, %v865
        %vm876 = vcmp.eq.f32.partialorder %v875, 8.507059e+37
        %v877 = vand.u32 %v865, 2147483648
        %v878 = vor.u32 1.1754944e-38, %v877
        %v879 = vsel %vm876, %v878, %v874
        %v880 = vmul.f32 1.0, %v879
        %v881 = vtanh.pop %v841
        %v882 = vxor.u32 %v842, 2147483648
        %v883 = vmul.f32 %v882, 1.442695
        %v884 = vpow.pop %v883
        %v885 = vadd.f32 %v884, 1.0
        %v886 = vrcp.pop %v885
        %v887 = vmul.f32 %v885, %v886
        %v888 = vsub.f32 1.0, %v887
        %v889 = vmul.f32 %v886, %v888
        %v890 = vadd.f32 %v886, %v889
        %vm891 = vweird.f32 %v885
        %vm892 = vweird.f32 %v886
        %vm893 = vmor %vm891, %vm892
        %v894 = vsel %vm893, %v886, %v890
        %v895 = vand.u32 2147483647, %v885
        %vm896 = vcmp.eq.f32.partialorder %v895, 8.507059e+37
        %v897 = vand.u32 %v885, 2147483648
        %v898 = vor.u32 1.1754944e-38, %v897
        %v899 = vsel %vm896, %v898, %v894
        %v900 = vmul.f32 1.0, %v899
        %v901 = vmul.f32 %v880, %v776
        %v902 = vmul.f32 %v861, %v881
        %v903 = vadd.f32 %v901, %v902
        %v904 = vtanh.pop %v903
        %v905 = vmul.f32 %v900, %v904
        %s906 = scalar_lea.vmem %s171, 64 [#allocation4]
        %v907 = vld [vmem:[%s906] sm:$0xff]
        %v908 = vld [vmem:[%s906 + $0x8] sm:$0xff]
        %v909 = vunpack.c.l.bf16 %v907
        %v910 = vunpack.c.h.bf16 %v907
        %v911 = vunpack.c.l.bf16 %v908
        %v912 = vunpack.c.h.bf16 %v908
        %v913 = vpack.c.bf16 %v905, %v905
        %914 = vmatpush.bf16.msra.mxu0 %v370
        %915 = vmatpush.bf16.msra.mxu0 %v366
        %916 = vmatpush.bf16.msra.mxu0 %v362
        %917 = vmatpush.bf16.msra.mxu0 %v358
        %918 = vmatpush.bf16.msra.mxu0 %v354
        %919 = vmatpush.bf16.msra.mxu0 %v350
        %920 = vmatpush.bf16.msra.mxu0 %v346
        %921 = vmatpush.bf16.msra.mxu0 %v342
        %922 = vmatmul.bf16.gmra.mxu0 %v913
        %v923 = vpop.f32.mrf.mxu0
        %v924 = vadd.f32 0.0, %v923
        %v925 = vpop.f32.mrf.mxu0
        %926 = vdwg.mxu0
        %927 = vmatpush.bf16.msra.mxu0 %v371
        %928 = vmatpush.bf16.msra.mxu0 %v367
        %929 = vmatpush.bf16.msra.mxu0 %v363
        %930 = vmatpush.bf16.msra.mxu0 %v359
        %931 = vmatpush.bf16.msra.mxu0 %v355
        %932 = vmatpush.bf16.msra.mxu0 %v351
        %933 = vmatpush.bf16.msra.mxu0 %v347
        %934 = vmatpush.bf16.msra.mxu0 %v343
        %935 = vmatmul.bf16.gmra.mxu0 %v913
        %v936 = vpop.f32.mrf.mxu0
        %v937 = vadd.f32 0.0, %v936
        %v938 = vpop.f32.mrf.mxu0
        %939 = vdwg.mxu0
        %940 = vmatpush.bf16.msra.mxu0 %v372
        %941 = vmatpush.bf16.msra.mxu0 %v368
        %942 = vmatpush.bf16.msra.mxu0 %v364
        %943 = vmatpush.bf16.msra.mxu0 %v360
        %944 = vmatpush.bf16.msra.mxu0 %v356
        %945 = vmatpush.bf16.msra.mxu0 %v352
        %946 = vmatpush.bf16.msra.mxu0 %v348
        %947 = vmatpush.bf16.msra.mxu0 %v344
        %948 = vmatmul.bf16.gmra.mxu0 %v913
        %v949 = vpop.f32.mrf.mxu0
        %v950 = vadd.f32 0.0, %v949
        %v951 = vpop.f32.mrf.mxu0
        %952 = vdwg.mxu0
        %953 = vmatpush.bf16.msra.mxu0 %v373
        %954 = vmatpush.bf16.msra.mxu0 %v369
        %955 = vmatpush.bf16.msra.mxu0 %v365
        %956 = vmatpush.bf16.msra.mxu0 %v361
        %957 = vmatpush.bf16.msra.mxu0 %v357
        %958 = vmatpush.bf16.msra.mxu0 %v353
        %959 = vmatpush.bf16.msra.mxu0 %v349
        %960 = vmatpush.bf16.msra.mxu0 %v345
        %961 = vmatmul.bf16.gmra.mxu0 %v913
        %v962 = vpop.f32.mrf.mxu0
        %v963 = vadd.f32 0.0, %v962
        %v964 = vpop.f32.mrf.mxu0
        %965 = vdwg.mxu0
        %v966 = vadd.f32 %v909, %v924
        %v967 = vadd.f32 %v910, %v937
        %v968 = vadd.f32 %v911, %v950
        %v969 = vadd.f32 %v912, %v963
        %v970 = vxor.u32 %v966, 2147483648
        %v971 = vmul.f32 %v970, 1.442695
        %v972 = vpow.pop %v971
        %v973 = vadd.f32 %v972, 1.0
        %v974 = vrcp.pop %v973
        %v975 = vmul.f32 %v973, %v974
        %v976 = vsub.f32 1.0, %v975
        %v977 = vmul.f32 %v974, %v976
        %v978 = vadd.f32 %v974, %v977
        %vm979 = vweird.f32 %v973
        %vm980 = vweird.f32 %v974
        %vm981 = vmor %vm979, %vm980
        %v982 = vsel %vm981, %v974, %v978
        %v983 = vand.u32 2147483647, %v973
        %vm984 = vcmp.eq.f32.partialorder %v983, 8.507059e+37
        %v985 = vand.u32 %v973, 2147483648
        %v986 = vor.u32 1.1754944e-38, %v985
        %v987 = vsel %vm984, %v986, %v982
        %v988 = vmul.f32 1.0, %v987
        %v989 = vxor.u32 %v967, 2147483648
        %v990 = vmul.f32 %v989, 1.442695
        %v991 = vpow.pop %v990
        %v992 = vadd.f32 %v991, 1.0
        %v993 = vrcp.pop %v992
        %v994 = vmul.f32 %v992, %v993
        %v995 = vsub.f32 1.0, %v994
        %v996 = vmul.f32 %v993, %v995
        %v997 = vadd.f32 %v993, %v996
        %vm998 = vweird.f32 %v992
        %vm999 = vweird.f32 %v993
        %vm1000 = vmor %vm998, %vm999
        %v1001 = vsel %vm1000, %v993, %v997
        %v1002 = vand.u32 2147483647, %v992
        %vm1003 = vcmp.eq.f32.partialorder %v1002, 8.507059e+37
        %v1004 = vand.u32 %v992, 2147483648
        %v1005 = vor.u32 1.1754944e-38, %v1004
        %v1006 = vsel %vm1003, %v1005, %v1001
        %v1007 = vmul.f32 1.0, %v1006
        %v1008 = vtanh.pop %v968
        %v1009 = vxor.u32 %v969, 2147483648
        %v1010 = vmul.f32 %v1009, 1.442695
        %v1011 = vpow.pop %v1010
        %v1012 = vadd.f32 %v1011, 1.0
        %v1013 = vrcp.pop %v1012
        %v1014 = vmul.f32 %v1012, %v1013
        %v1015 = vsub.f32 1.0, %v1014
        %v1016 = vmul.f32 %v1013, %v1015
        %v1017 = vadd.f32 %v1013, %v1016
        %vm1018 = vweird.f32 %v1012
        %vm1019 = vweird.f32 %v1013
        %vm1020 = vmor %vm1018, %vm1019
        %v1021 = vsel %vm1020, %v1013, %v1017
        %v1022 = vand.u32 2147483647, %v1012
        %vm1023 = vcmp.eq.f32.partialorder %v1022, 8.507059e+37
        %v1024 = vand.u32 %v1012, 2147483648
        %v1025 = vor.u32 1.1754944e-38, %v1024
        %v1026 = vsel %vm1023, %v1025, %v1021
        %v1027 = vmul.f32 1.0, %v1026
        %v1028 = vmul.f32 %v1007, %v903
        %v1029 = vmul.f32 %v988, %v1008
        %v1030 = vadd.f32 %v1028, %v1029
        %v1031 = vtanh.pop %v1030
        %v1032 = vmul.f32 %v1027, %v1031
        %s1033 = scalar_lea.vmem %s171, 80 [#allocation4]
        %v1034 = vld [vmem:[%s1033] sm:$0xff]
        %v1035 = vld [vmem:[%s1033 + $0x8] sm:$0xff]
        %v1036 = vunpack.c.l.bf16 %v1034
        %v1037 = vunpack.c.h.bf16 %v1034
        %v1038 = vunpack.c.l.bf16 %v1035
        %v1039 = vunpack.c.h.bf16 %v1035
        %v1040 = vpack.c.bf16 %v1032, %v1032
        %1041 = vmatpush.bf16.msra.mxu0 %v370
        %1042 = vmatpush.bf16.msra.mxu0 %v366
        %1043 = vmatpush.bf16.msra.mxu0 %v362
        %1044 = vmatpush.bf16.msra.mxu0 %v358
        %1045 = vmatpush.bf16.msra.mxu0 %v354
        %1046 = vmatpush.bf16.msra.mxu0 %v350
        %1047 = vmatpush.bf16.msra.mxu0 %v346
        %1048 = vmatpush.bf16.msra.mxu0 %v342
        %1049 = vmatmul.bf16.gmra.mxu0 %v1040
        %v1050 = vpop.f32.mrf.mxu0
        %v1051 = vadd.f32 0.0, %v1050
        %v1052 = vpop.f32.mrf.mxu0
        %1053 = vdwg.mxu0
        %1054 = vmatpush.bf16.msra.mxu0 %v371
        %1055 = vmatpush.bf16.msra.mxu0 %v367
        %1056 = vmatpush.bf16.msra.mxu0 %v363
        %1057 = vmatpush.bf16.msra.mxu0 %v359
        %1058 = vmatpush.bf16.msra.mxu0 %v355
        %1059 = vmatpush.bf16.msra.mxu0 %v351
        %1060 = vmatpush.bf16.msra.mxu0 %v347
        %1061 = vmatpush.bf16.msra.mxu0 %v343
        %1062 = vmatmul.bf16.gmra.mxu0 %v1040
        %v1063 = vpop.f32.mrf.mxu0
        %v1064 = vadd.f32 0.0, %v1063
        %v1065 = vpop.f32.mrf.mxu0
        %1066 = vdwg.mxu0
        %1067 = vmatpush.bf16.msra.mxu0 %v372
        %1068 = vmatpush.bf16.msra.mxu0 %v368
        %1069 = vmatpush.bf16.msra.mxu0 %v364
        %1070 = vmatpush.bf16.msra.mxu0 %v360
        %1071 = vmatpush.bf16.msra.mxu0 %v356
        %1072 = vmatpush.bf16.msra.mxu0 %v352
        %1073 = vmatpush.bf16.msra.mxu0 %v348
        %1074 = vmatpush.bf16.msra.mxu0 %v344
        %1075 = vmatmul.bf16.gmra.mxu0 %v1040
        %v1076 = vpop.f32.mrf.mxu0
        %v1077 = vadd.f32 0.0, %v1076
        %v1078 = vpop.f32.mrf.mxu0
        %1079 = vdwg.mxu0
        %1080 = vmatpush.bf16.msra.mxu0 %v373
        %1081 = vmatpush.bf16.msra.mxu0 %v369
        %1082 = vmatpush.bf16.msra.mxu0 %v365
        %1083 = vmatpush.bf16.msra.mxu0 %v361
        %1084 = vmatpush.bf16.msra.mxu0 %v357
        %1085 = vmatpush.bf16.msra.mxu0 %v353
        %1086 = vmatpush.bf16.msra.mxu0 %v349
        %1087 = vmatpush.bf16.msra.mxu0 %v345
        %1088 = vmatmul.bf16.gmra.mxu0 %v1040
        %v1089 = vpop.f32.mrf.mxu0
        %v1090 = vadd.f32 0.0, %v1089
        %v1091 = vpop.f32.mrf.mxu0
        %1092 = vdwg.mxu0
        %v1093 = vadd.f32 %v1036, %v1051
        %v1094 = vadd.f32 %v1037, %v1064
        %v1095 = vadd.f32 %v1038, %v1077
        %v1096 = vadd.f32 %v1039, %v1090
        %v1097 = vxor.u32 %v1093, 2147483648
        %v1098 = vmul.f32 %v1097, 1.442695
        %v1099 = vpow.pop %v1098
        %v1100 = vadd.f32 %v1099, 1.0
        %v1101 = vrcp.pop %v1100
        %v1102 = vmul.f32 %v1100, %v1101
        %v1103 = vsub.f32 1.0, %v1102
        %v1104 = vmul.f32 %v1101, %v1103
        %v1105 = vadd.f32 %v1101, %v1104
        %vm1106 = vweird.f32 %v1100
        %vm1107 = vweird.f32 %v1101
        %vm1108 = vmor %vm1106, %vm1107
        %v1109 = vsel %vm1108, %v1101, %v1105
        %v1110 = vand.u32 2147483647, %v1100
        %vm1111 = vcmp.eq.f32.partialorder %v1110, 8.507059e+37
        %v1112 = vand.u32 %v1100, 2147483648
        %v1113 = vor.u32 1.1754944e-38, %v1112
        %v1114 = vsel %vm1111, %v1113, %v1109
        %v1115 = vmul.f32 1.0, %v1114
        %v1116 = vxor.u32 %v1094, 2147483648
        %v1117 = vmul.f32 %v1116, 1.442695
        %v1118 = vpow.pop %v1117
        %v1119 = vadd.f32 %v1118, 1.0
        %v1120 = vrcp.pop %v1119
        %v1121 = vmul.f32 %v1119, %v1120
        %v1122 = vsub.f32 1.0, %v1121
        %v1123 = vmul.f32 %v1120, %v1122
        %v1124 = vadd.f32 %v1120, %v1123
        %vm1125 = vweird.f32 %v1119
        %vm1126 = vweird.f32 %v1120
        %vm1127 = vmor %vm1125, %vm1126
        %v1128 = vsel %vm1127, %v1120, %v1124
        %v1129 = vand.u32 2147483647, %v1119
        %vm1130 = vcmp.eq.f32.partialorder %v1129, 8.507059e+37
        %v1131 = vand.u32 %v1119, 2147483648
        %v1132 = vor.u32 1.1754944e-38, %v1131
        %v1133 = vsel %vm1130, %v1132, %v1128
        %v1134 = vmul.f32 1.0, %v1133
        %v1135 = vtanh.pop %v1095
        %v1136 = vxor.u32 %v1096, 2147483648
        %v1137 = vmul.f32 %v1136, 1.442695
        %v1138 = vpow.pop %v1137
        %v1139 = vadd.f32 %v1138, 1.0
        %v1140 = vrcp.pop %v1139
        %v1141 = vmul.f32 %v1139, %v1140
        %v1142 = vsub.f32 1.0, %v1141
        %v1143 = vmul.f32 %v1140, %v1142
        %v1144 = vadd.f32 %v1140, %v1143
        %vm1145 = vweird.f32 %v1139
        %vm1146 = vweird.f32 %v1140
        %vm1147 = vmor %vm1145, %vm1146
        %v1148 = vsel %vm1147, %v1140, %v1144
        %v1149 = vand.u32 2147483647, %v1139
        %vm1150 = vcmp.eq.f32.partialorder %v1149, 8.507059e+37
        %v1151 = vand.u32 %v1139, 2147483648
        %v1152 = vor.u32 1.1754944e-38, %v1151
        %v1153 = vsel %vm1150, %v1152, %v1148
        %v1154 = vmul.f32 1.0, %v1153
        %v1155 = vmul.f32 %v1134, %v1030
        %v1156 = vmul.f32 %v1115, %v1135
        %v1157 = vadd.f32 %v1155, %v1156
        %v1158 = vtanh.pop %v1157
        %v1159 = vmul.f32 %v1154, %v1158
        %s1160 = scalar_lea.vmem %s171, 96 [#allocation4]
        %v1161 = vld [vmem:[%s1160] sm:$0xff]
        %v1162 = vld [vmem:[%s1160 + $0x8] sm:$0xff]
        %v1163 = vunpack.c.l.bf16 %v1161
        %v1164 = vunpack.c.h.bf16 %v1161
        %v1165 = vunpack.c.l.bf16 %v1162
        %v1166 = vunpack.c.h.bf16 %v1162
        %v1167 = vpack.c.bf16 %v1159, %v1159
        %1168 = vmatpush.bf16.msra.mxu0 %v370
        %1169 = vmatpush.bf16.msra.mxu0 %v366
        %1170 = vmatpush.bf16.msra.mxu0 %v362
        %1171 = vmatpush.bf16.msra.mxu0 %v358
        %1172 = vmatpush.bf16.msra.mxu0 %v354
        %1173 = vmatpush.bf16.msra.mxu0 %v350
        %1174 = vmatpush.bf16.msra.mxu0 %v346
        %1175 = vmatpush.bf16.msra.mxu0 %v342
        %1176 = vmatmul.bf16.gmra.mxu0 %v1167
        %v1177 = vpop.f32.mrf.mxu0
        %v1178 = vadd.f32 0.0, %v1177
        %v1179 = vpop.f32.mrf.mxu0
        %1180 = vdwg.mxu0
        %1181 = vmatpush.bf16.msra.mxu0 %v371
        %1182 = vmatpush.bf16.msra.mxu0 %v367
        %1183 = vmatpush.bf16.msra.mxu0 %v363
        %1184 = vmatpush.bf16.msra.mxu0 %v359
        %1185 = vmatpush.bf16.msra.mxu0 %v355
        %1186 = vmatpush.bf16.msra.mxu0 %v351
        %1187 = vmatpush.bf16.msra.mxu0 %v347
        %1188 = vmatpush.bf16.msra.mxu0 %v343
        %1189 = vmatmul.bf16.gmra.mxu0 %v1167
        %v1190 = vpop.f32.mrf.mxu0
        %v1191 = vadd.f32 0.0, %v1190
        %v1192 = vpop.f32.mrf.mxu0
        %1193 = vdwg.mxu0
        %1194 = vmatpush.bf16.msra.mxu0 %v372
        %1195 = vmatpush.bf16.msra.mxu0 %v368
        %1196 = vmatpush.bf16.msra.mxu0 %v364
        %1197 = vmatpush.bf16.msra.mxu0 %v360
        %1198 = vmatpush.bf16.msra.mxu0 %v356
        %1199 = vmatpush.bf16.msra.mxu0 %v352
        %1200 = vmatpush.bf16.msra.mxu0 %v348
        %1201 = vmatpush.bf16.msra.mxu0 %v344
        %1202 = vmatmul.bf16.gmra.mxu0 %v1167
        %v1203 = vpop.f32.mrf.mxu0
        %v1204 = vadd.f32 0.0, %v1203
        %v1205 = vpop.f32.mrf.mxu0
        %1206 = vdwg.mxu0
        %1207 = vmatpush.bf16.msra.mxu0 %v373
        %1208 = vmatpush.bf16.msra.mxu0 %v369
        %1209 = vmatpush.bf16.msra.mxu0 %v365
        %1210 = vmatpush.bf16.msra.mxu0 %v361
        %1211 = vmatpush.bf16.msra.mxu0 %v357
        %1212 = vmatpush.bf16.msra.mxu0 %v353
        %1213 = vmatpush.bf16.msra.mxu0 %v349
        %1214 = vmatpush.bf16.msra.mxu0 %v345
        %1215 = vmatmul.bf16.gmra.mxu0 %v1167
        %v1216 = vpop.f32.mrf.mxu0
        %v1217 = vadd.f32 0.0, %v1216
        %v1218 = vpop.f32.mrf.mxu0
        %1219 = vdwg.mxu0
        %v1220 = vadd.f32 %v1163, %v1178
        %v1221 = vadd.f32 %v1164, %v1191
        %v1222 = vadd.f32 %v1165, %v1204
        %v1223 = vadd.f32 %v1166, %v1217
        %v1224 = vxor.u32 %v1220, 2147483648
        %v1225 = vmul.f32 %v1224, 1.442695
        %v1226 = vpow.pop %v1225
        %v1227 = vadd.f32 %v1226, 1.0
        %v1228 = vrcp.pop %v1227
        %v1229 = vmul.f32 %v1227, %v1228
        %v1230 = vsub.f32 1.0, %v1229
        %v1231 = vmul.f32 %v1228, %v1230
        %v1232 = vadd.f32 %v1228, %v1231
        %vm1233 = vweird.f32 %v1227
        %vm1234 = vweird.f32 %v1228
        %vm1235 = vmor %vm1233, %vm1234
        %v1236 = vsel %vm1235, %v1228, %v1232
        %v1237 = vand.u32 2147483647, %v1227
        %vm1238 = vcmp.eq.f32.partialorder %v1237, 8.507059e+37
        %v1239 = vand.u32 %v1227, 2147483648
        %v1240 = vor.u32 1.1754944e-38, %v1239
        %v1241 = vsel %vm1238, %v1240, %v1236
        %v1242 = vmul.f32 1.0, %v1241
        %v1243 = vxor.u32 %v1221, 2147483648
        %v1244 = vmul.f32 %v1243, 1.442695
        %v1245 = vpow.pop %v1244
        %v1246 = vadd.f32 %v1245, 1.0
        %v1247 = vrcp.pop %v1246
        %v1248 = vmul.f32 %v1246, %v1247
        %v1249 = vsub.f32 1.0, %v1248
        %v1250 = vmul.f32 %v1247, %v1249
        %v1251 = vadd.f32 %v1247, %v1250
        %vm1252 = vweird.f32 %v1246
        %vm1253 = vweird.f32 %v1247
        %vm1254 = vmor %vm1252, %vm1253
        %v1255 = vsel %vm1254, %v1247, %v1251
        %v1256 = vand.u32 2147483647, %v1246
        %vm1257 = vcmp.eq.f32.partialorder %v1256, 8.507059e+37
        %v1258 = vand.u32 %v1246, 2147483648
        %v1259 = vor.u32 1.1754944e-38, %v1258
        %v1260 = vsel %vm1257, %v1259, %v1255
        %v1261 = vmul.f32 1.0, %v1260
        %v1262 = vtanh.pop %v1222
        %v1263 = vxor.u32 %v1223, 2147483648
        %v1264 = vmul.f32 %v1263, 1.442695
        %v1265 = vpow.pop %v1264
        %v1266 = vadd.f32 %v1265, 1.0
        %v1267 = vrcp.pop %v1266
        %v1268 = vmul.f32 %v1266, %v1267
        %v1269 = vsub.f32 1.0, %v1268
        %v1270 = vmul.f32 %v1267, %v1269
        %v1271 = vadd.f32 %v1267, %v1270
        %vm1272 = vweird.f32 %v1266
        %vm1273 = vweird.f32 %v1267
        %vm1274 = vmor %vm1272, %vm1273
        %v1275 = vsel %vm1274, %v1267, %v1271
        %v1276 = vand.u32 2147483647, %v1266
        %vm1277 = vcmp.eq.f32.partialorder %v1276, 8.507059e+37
        %v1278 = vand.u32 %v1266, 2147483648
        %v1279 = vor.u32 1.1754944e-38, %v1278
        %v1280 = vsel %vm1277, %v1279, %v1275
        %v1281 = vmul.f32 1.0, %v1280
        %v1282 = vmul.f32 %v1261, %v1157
        %v1283 = vmul.f32 %v1242, %v1262
        %v1284 = vadd.f32 %v1282, %v1283
        %v1285 = vtanh.pop %v1284
        %v1286 = vmul.f32 %v1281, %v1285
        %s1287 = scalar_lea.vmem %s171, 112 [#allocation4]
        %v1288 = vld [vmem:[%s1287] sm:$0xff]
        %v1289 = vld [vmem:[%s1287 + $0x8] sm:$0xff]
        %v1290 = vunpack.c.l.bf16 %v1288
        %v1291 = vunpack.c.h.bf16 %v1288
        %v1292 = vunpack.c.l.bf16 %v1289
        %v1293 = vunpack.c.h.bf16 %v1289
        %v1294 = vpack.c.bf16 %v1286, %v1286
        %1295 = vmatpush.bf16.msra.mxu0 %v370
        %1296 = vmatpush.bf16.msra.mxu0 %v366
        %1297 = vmatpush.bf16.msra.mxu0 %v362
        %1298 = vmatpush.bf16.msra.mxu0 %v358
        %1299 = vmatpush.bf16.msra.mxu0 %v354
        %1300 = vmatpush.bf16.msra.mxu0 %v350
        %1301 = vmatpush.bf16.msra.mxu0 %v346
        %1302 = vmatpush.bf16.msra.mxu0 %v342
        %1303 = vmatmul.bf16.gmra.mxu0 %v1294
        %v1304 = vpop.f32.mrf.mxu0
        %v1305 = vadd.f32 0.0, %v1304
        %v1306 = vpop.f32.mrf.mxu0
        %1307 = vdwg.mxu0
        %1308 = vmatpush.bf16.msra.mxu0 %v371
        %1309 = vmatpush.bf16.msra.mxu0 %v367
        %1310 = vmatpush.bf16.msra.mxu0 %v363
        %1311 = vmatpush.bf16.msra.mxu0 %v359
        %1312 = vmatpush.bf16.msra.mxu0 %v355
        %1313 = vmatpush.bf16.msra.mxu0 %v351
        %1314 = vmatpush.bf16.msra.mxu0 %v347
        %1315 = vmatpush.bf16.msra.mxu0 %v343
        %1316 = vmatmul.bf16.gmra.mxu0 %v1294
        %v1317 = vpop.f32.mrf.mxu0
        %v1318 = vadd.f32 0.0, %v1317
        %v1319 = vpop.f32.mrf.mxu0
        %1320 = vdwg.mxu0
        %1321 = vmatpush.bf16.msra.mxu0 %v372
        %1322 = vmatpush.bf16.msra.mxu0 %v368
        %1323 = vmatpush.bf16.msra.mxu0 %v364
        %1324 = vmatpush.bf16.msra.mxu0 %v360
        %1325 = vmatpush.bf16.msra.mxu0 %v356
        %1326 = vmatpush.bf16.msra.mxu0 %v352
        %1327 = vmatpush.bf16.msra.mxu0 %v348
        %1328 = vmatpush.bf16.msra.mxu0 %v344
        %1329 = vmatmul.bf16.gmra.mxu0 %v1294
        %v1330 = vpop.f32.mrf.mxu0
        %v1331 = vadd.f32 0.0, %v1330
        %v1332 = vpop.f32.mrf.mxu0
        %1333 = vdwg.mxu0
        %1334 = vmatpush.bf16.msra.mxu0 %v373
        %1335 = vmatpush.bf16.msra.mxu0 %v369
        %1336 = vmatpush.bf16.msra.mxu0 %v365
        %1337 = vmatpush.bf16.msra.mxu0 %v361
        %1338 = vmatpush.bf16.msra.mxu0 %v357
        %1339 = vmatpush.bf16.msra.mxu0 %v353
        %1340 = vmatpush.bf16.msra.mxu0 %v349
        %1341 = vmatpush.bf16.msra.mxu0 %v345
        %1342 = vmatmul.bf16.gmra.mxu0 %v1294
        %v1343 = vpop.f32.mrf.mxu0
        %v1344 = vadd.f32 0.0, %v1343
        %v1345 = vpop.f32.mrf.mxu0
        %1346 = vdwg.mxu0
        %v1347 = vadd.f32 %v1290, %v1305
        %v1348 = vadd.f32 %v1291, %v1318
        %v1349 = vadd.f32 %v1292, %v1331
        %v1350 = vadd.f32 %v1293, %v1344
        %v1351 = vxor.u32 %v1347, 2147483648
        %v1352 = vmul.f32 %v1351, 1.442695
        %v1353 = vpow.pop %v1352
        %v1354 = vadd.f32 %v1353, 1.0
        %v1355 = vrcp.pop %v1354
        %v1356 = vmul.f32 %v1354, %v1355
        %v1357 = vsub.f32 1.0, %v1356
        %v1358 = vmul.f32 %v1355, %v1357
        %v1359 = vadd.f32 %v1355, %v1358
        %vm1360 = vweird.f32 %v1354
        %vm1361 = vweird.f32 %v1355
        %vm1362 = vmor %vm1360, %vm1361
        %v1363 = vsel %vm1362, %v1355, %v1359
        %v1364 = vand.u32 2147483647, %v1354
        %vm1365 = vcmp.eq.f32.partialorder %v1364, 8.507059e+37
        %v1366 = vand.u32 %v1354, 2147483648
        %v1367 = vor.u32 1.1754944e-38, %v1366
        %v1368 = vsel %vm1365, %v1367, %v1363
        %v1369 = vmul.f32 1.0, %v1368
        %v1370 = vxor.u32 %v1348, 2147483648
        %v1371 = vmul.f32 %v1370, 1.442695
        %v1372 = vpow.pop %v1371
        %v1373 = vadd.f32 %v1372, 1.0
        %v1374 = vrcp.pop %v1373
        %v1375 = vmul.f32 %v1373, %v1374
        %v1376 = vsub.f32 1.0, %v1375
        %v1377 = vmul.f32 %v1374, %v1376
        %v1378 = vadd.f32 %v1374, %v1377
        %vm1379 = vweird.f32 %v1373
        %vm1380 = vweird.f32 %v1374
        %vm1381 = vmor %vm1379, %vm1380
        %v1382 = vsel %vm1381, %v1374, %v1378
        %v1383 = vand.u32 2147483647, %v1373
        %vm1384 = vcmp.eq.f32.partialorder %v1383, 8.507059e+37
        %v1385 = vand.u32 %v1373, 2147483648
        %v1386 = vor.u32 1.1754944e-38, %v1385
        %v1387 = vsel %vm1384, %v1386, %v1382
        %v1388 = vmul.f32 1.0, %v1387
        %v1389 = vtanh.pop %v1349
        %v1390 = vxor.u32 %v1350, 2147483648
        %v1391 = vmul.f32 %v1390, 1.442695
        %v1392 = vpow.pop %v1391
        %v1393 = vadd.f32 %v1392, 1.0
        %v1394 = vrcp.pop %v1393
        %v1395 = vmul.f32 %v1393, %v1394
        %v1396 = vsub.f32 1.0, %v1395
        %v1397 = vmul.f32 %v1394, %v1396
        %v1398 = vadd.f32 %v1394, %v1397
        %vm1399 = vweird.f32 %v1393
        %vm1400 = vweird.f32 %v1394
        %vm1401 = vmor %vm1399, %vm1400
        %v1402 = vsel %vm1401, %v1394, %v1398
        %v1403 = vand.u32 2147483647, %v1393
        %vm1404 = vcmp.eq.f32.partialorder %v1403, 8.507059e+37
        %v1405 = vand.u32 %v1393, 2147483648
        %v1406 = vor.u32 1.1754944e-38, %v1405
        %v1407 = vsel %vm1404, %v1406, %v1402
        %v1408 = vmul.f32 1.0, %v1407
        %v1409 = vmul.f32 %v1388, %v1284
        %v1410 = vmul.f32 %v1369, %v1389
        %v1411 = vadd.f32 %v1409, %v1410
        %v1412 = vtanh.pop %v1411
        %v1413 = vmul.f32 %v1408, %v1412
        %1414 = vst [vmem:[#allocation2] sm:$0xff] %v1413
        %1415 = vst [vmem:[#allocation3] sm:$0xff] %v1411
        %p1416 = scmp.eq.s32.totalorder %s25, 3
        // Predicated region
        $region41: #{tpu_custom_call.1} parent=27 // pred_check
          %p1417 = pneg %p1416
        $region42: #{tpu_custom_call.1} parent=27 // pred_check_branch
          %1419 = sbr.rel (%p1417) target = $region44
        $region43: #{tpu_custom_call.1} parent=27 // pred_region
          %1420 = vst [vmem:[%s197] sm:$0xff] %v1413
        $region44: #{tpu_custom_call.1} parent=27 // pred_fallthru
          _
        %s1421 = sand.u32 %s89, 1
        %s1422 = scalar_lea.sflag [#allocation6], %s1421
        %s1423 = sand.u32 %s89, 1
        %s1424 = smul.addr %s1423, 8
        %s1425 = scalar_lea.vmem [#allocation9], %s1424
        // Predicated region
        $region45: #{tpu_custom_call.1} parent=27 // pred_check
          %p1426 = pneg %p99
        $region46: #{tpu_custom_call.1} parent=27 // pred_check_branch
          %1428 = sbr.rel (%p1426) target = $region48
        $region47: #{tpu_custom_call.1} parent=27 // pred_region
          %1430 = vsyncadd %s1422, 0
          %s1431 = smul.addr %s24, 8
          %s1432 = scalar_lea.hbm %s2, %s1431
          %s1434 = sshll.u32 %s1425, 4
          %s1435 = int_to_ptr.vmem [resolvable:$true] %s1434
          %s1436 = sshll.u32 %s1432, 4
          %s1437 = int_to_ptr.hbm [resolvable:$true] %s1436
          %1439 = dma.vmem_to_hbm [thread:$0]  %s1435, 128, %s1437, %s1422
        $region48: #{tpu_custom_call.1} parent=27 // pred_fallthru
          _
      $region28: #{tpu_custom_call.1} parent=5 // pred_fallthru
        _
      %p1440 = scmp.le.s32.totalorder 2, %s15
      // Predicated region
      $region49: #{tpu_custom_call.1} parent=5 // pred_check
        %p1441 = pneg %p1440
      $region50: #{tpu_custom_call.1} parent=5 // pred_check_branch
        %1443 = sbr.rel (%p1441) target = $region52
      $region51: #{tpu_custom_call.1} parent=5 // pred_region
        %s1444 = ssub.s32 %s15, 2
        // Predicated region
        $region53: #{tpu_custom_call.1} parent=51 // pred_check
          %p1445 = pneg %p105
        $region54: #{tpu_custom_call.1} parent=51 // pred_check_branch
          %1447 = sbr.rel (%p1445) target = $region56
        $region55: #{tpu_custom_call.1} parent=51 // pred_region
          %s1448 = sand.u32 %s90, 1
          %s1449 = scalar_lea.sflag [#allocation6], %s1448
          %s1450 = sand.u32 %s90, 1
          %s1451 = smul.addr %s1450, 8
          %s1452 = scalar_lea.vmem [#allocation9], %s1451
          %1454 = dma.done %s1449, 128
        $region56: #{tpu_custom_call.1} parent=51 // pred_fallthru
          _
      $region52: #{tpu_custom_call.1} parent=5 // pred_fallthru
        _
    $region6: #{tpu_custom_call.1} parent=1 // loop_footer
      %s19 = sadd.s32 1, %s15
    $region7: #{tpu_custom_call.1} parent=1 // loop_footer_branch
      %14 = sbr.rel target = $region3
    $region8: #{tpu_custom_call.1} parent=1 // loop_exit
      _
    %1455 = vsyncpa [#allocation5], 1
    %s1456 = scalar_lea.sflag [#allocation5], 1
    %1457 = vsyncpa %s1456, 1
    %1458 = vsyncpa [#allocation8], 1
    %1459 = vsyncpa [#allocation6], 1
    %s1460 = scalar_lea.sflag [#allocation6], 1
    %1461 = vsyncpa %s1460, 1

</llo_original>
